<compile_context>
chip_gen: v5e
topology: v5e:2x2
jax: 0.10.0
libtpu: 0.0.40
codegen_flags: <defaults>
</compile_context>

<pallas_src>
import jax
import jax.numpy as jnp
from jax.experimental import pallas as pl
from jax.experimental.pallas import tpu as pltpu


def _seg_head_kernel(xp_ref, w1_ref, b1_ref, w2_ref, b2_ref, out_ref):
    # xp_ref : (1, H+2, W+2, C)  zero-padded NHWC input tile (one batch elem)
    # w1_ref : (9*C, HID)        3x3 conv weights, im2col/tap-major rows
    # b1_ref : (1, HID)
    # w2_ref : (HID, K)          1x1 conv weights
    # b2_ref : (1, K)
    # out_ref: (1, K, H*W)       lane-dense logits (H*W on the 128-lane axis)
    Hp = xp_ref.shape[1]
    Wp = xp_ref.shape[2]
    C = xp_ref.shape[3]
    H, W = Hp - 2, Wp - 2
    HW = H * W

    xp = xp_ref[0]  # (H+2, W+2, C)

    # im2col: the 9 shifted taps are concatenated along the channel (lane)
    # axis so the whole 3x3 conv becomes a single MXU matmul with K = 9*C.
    taps = [
        xp[dy:dy + H, dx:dx + W, :].reshape(HW, C)
        for dy in range(3) for dx in range(3)
    ]
    col = jnp.concatenate(taps, axis=1)  # (H*W, 9*C)

    hidden = jnp.dot(col, w1_ref[...], preferred_element_type=jnp.float32)
    hidden = jnp.maximum(hidden + b1_ref[...], 0.0)  # (H*W, HID), f32 bias+ReLU

    logits = jnp.dot(hidden, w2_ref[...], preferred_element_type=jnp.float32)
    logits = logits + b2_ref[...]  # (H*W, K)

    # Small in-kernel transpose (XLU) -> lane-dense (K, H*W) store; kills the
    # masked 21-lane stores and the wrapper's output-transpose HBM pass.
    out_ref[0] = logits.T.astype(out_ref.dtype)


def segmentation_forward(x_nchw, w1, b1, w2, b2):
    """Equivalent of SegmentationModelOutputWrapper(model)(x) == model(x)['out'].

    x_nchw: (N, C, H, W) float32
    w1: (3, 3, C, HID), b1: (HID,)
    w2: (HID, K),       b2: (K,)
    returns: (N, K, H, W) float32 logits
    """
    N, C, H, W = x_nchw.shape
    HID = w1.shape[3]
    K = w2.shape[1]
    HW = H * W

    # Input glue: NCHW -> NHWC + spatial halo pad (single fused XLA pass).
    xp = jnp.pad(jnp.transpose(x_nchw, (0, 2, 3, 1)),
                 ((0, 0), (1, 1), (1, 1), (0, 0)))

    # One-time weight folding so the conv is a single im2col matmul in-kernel.
    w1f = w1.reshape(9 * C, HID)   # row (dy*3+dx)*C + c  <->  w1[dy, dx, c, :]
    b1r = b1.reshape(1, HID)
    b2r = b2.reshape(1, K)

    flops = 2 * N * HW * (9 * C * HID + HID * K)
    bytes_accessed = 4 * (N * (H + 2) * (W + 2) * C + 9 * C * HID + HID
                          + HID * K + K + N * K * HW)

    out = pl.pallas_call(
        _seg_head_kernel,
        out_shape=jax.ShapeDtypeStruct((N, K, HW), jnp.float32),
        grid_spec=pltpu.PrefetchScalarGridSpec(
            num_scalar_prefetch=0,
            grid=(N,),
            in_specs=[
                pl.BlockSpec((1, H + 2, W + 2, C), lambda n: (n, 0, 0, 0)),
                pl.BlockSpec((9 * C, HID), lambda n: (0, 0)),
                pl.BlockSpec((1, HID), lambda n: (0, 0)),
                pl.BlockSpec((HID, K), lambda n: (0, 0)),
                pl.BlockSpec((1, K), lambda n: (0, 0)),
            ],
            out_specs=pl.BlockSpec((1, K, HW), lambda n: (n, 0, 0)),
        ),
        compiler_params=pltpu.CompilerParams(
            dimension_semantics=("parallel",),
        ),
        cost_estimate=pl.CostEstimate(
            flops=flops, transcendentals=0, bytes_accessed=bytes_accessed),
    )(xp, w1f, b1r, w2, b2r)

    # (N, K, H*W) -> (N, K, H, W): a pure reshape, no HBM transpose pass.
    return out.reshape(N, K, H, W)


def _reference_forward(x_nchw, w1, b1, w2, b2):
    """Pure-JAX reference (lax conv) for correctness checking."""
    x_nhwc = jnp.transpose(x_nchw, (0, 2, 3, 1))
    h = jax.lax.conv_general_dilated(
        x_nhwc, w1, window_strides=(1, 1), padding="SAME",
        dimension_numbers=("NHWC", "HWIO", "NHWC"),
    ) + b1
    h = jnp.maximum(h, 0.0)
    out = jax.lax.conv_general_dilated(
        h, w2.reshape(1, 1, *w2.shape), window_strides=(1, 1), padding="SAME",
        dimension_numbers=("NHWC", "HWIO", "NHWC"),
    ) + b2
    return jnp.transpose(out, (0, 3, 1, 2))


if __name__ == "__main__":
    # Small deterministic synthetic setup.
    N, C, H, W = 2, 4, 16, 16
    HID, K = 32, 21  # 21 classes, VOC-style segmentation head

    key = jax.random.PRNGKey(0)
    kx, k1, k2, k3, k4 = jax.random.split(key, 5)

    x = jax.random.normal(kx, (N, C, H, W), dtype=jnp.float32)
    w1 = jax.random.normal(k1, (3, 3, C, HID), dtype=jnp.float32) * 0.1
    b1 = jax.random.normal(k2, (HID,), dtype=jnp.float32) * 0.1
    w2 = jax.random.normal(k3, (HID, K), dtype=jnp.float32) * 0.1
    b2 = jax.random.normal(k4, (K,), dtype=jnp.float32) * 0.1

    out = jax.jit(segmentation_forward)(x, w1, b1, w2, b2)
    jax.block_until_ready(out)

    ref = _reference_forward(x, w1, b1, w2, b2)
    jax.block_until_ready(ref)

    assert out.shape == (N, K, H, W), out.shape
    if not jnp.allclose(out, ref, atol=1e-4, rtol=1e-4):
        raise AssertionError("Pallas kernel output mismatches JAX reference")

    print("KERNEL_OK")
</pallas_src>

<mosaic_0001>
module attributes {stable_mosaic.version = 11 : i64} {
  func.func @_seg_head_kernel(%arg0: i32, %arg1: memref<1x18x18x4xf32, #tpu.memory_space<vmem>>, %arg2: memref<36x32xf32, #tpu.memory_space<vmem>>, %arg3: memref<1x32xf32, #tpu.memory_space<vmem>>, %arg4: memref<32x21xf32, #tpu.memory_space<vmem>>, %arg5: memref<1x21xf32, #tpu.memory_space<vmem>>, %arg6: memref<1x21x256xf32, #tpu.memory_space<vmem>>) attributes {dimension_semantics = [#tpu.dimension_semantics<parallel>], iteration_bounds = array<i64: 2>, scalar_prefetch = 0 : i64, scratch_operands = 0 : i64, tpu.core_type = #tpu.core_type<tc>, window_params = [{transform_indices = @transform_0, window_bounds = array<i64: 1, 18, 18, 4>}, {pipeline_mode = #tpu.pipeline_mode<synchronous>, transform_indices = @transform_1, window_bounds = array<i64: 36, 32>}, {pipeline_mode = #tpu.pipeline_mode<synchronous>, transform_indices = @transform_2, window_bounds = array<i64: 1, 32>}, {pipeline_mode = #tpu.pipeline_mode<synchronous>, transform_indices = @transform_3, window_bounds = array<i64: 32, 21>}, {pipeline_mode = #tpu.pipeline_mode<synchronous>, transform_indices = @transform_4, window_bounds = array<i64: 1, 21>}, {transform_indices = @transform_5, window_bounds = array<i64: 1, 21, 256>}]} {
    %c0 = arith.constant 0 : index
    %c0_0 = arith.constant 0 : index
    %c0_1 = arith.constant 0 : index
    %c0_2 = arith.constant 0 : index
    %0 = vector.load %arg1[%c0, %c0_0, %c0_1, %c0_2] : memref<1x18x18x4xf32, #tpu.memory_space<vmem>>, vector<1x18x18x4xf32>
    %1 = vector.shape_cast %0 : vector<1x18x18x4xf32> to vector<18x18x4xf32>
    %2 = vector.extract_strided_slice %1 {offsets = [0, 0, 0], sizes = [16, 16, 4], strides = [1, 1, 1]} : vector<18x18x4xf32> to vector<16x16x4xf32>
    %3 = vector.shape_cast %2 : vector<16x16x4xf32> to vector<256x4xf32>
    %4 = vector.extract_strided_slice %1 {offsets = [0, 1, 0], sizes = [16, 16, 4], strides = [1, 1, 1]} : vector<18x18x4xf32> to vector<16x16x4xf32>
    %5 = vector.shape_cast %4 : vector<16x16x4xf32> to vector<256x4xf32>
    %6 = vector.extract_strided_slice %1 {offsets = [0, 2, 0], sizes = [16, 16, 4], strides = [1, 1, 1]} : vector<18x18x4xf32> to vector<16x16x4xf32>
    %7 = vector.shape_cast %6 : vector<16x16x4xf32> to vector<256x4xf32>
    %8 = vector.extract_strided_slice %1 {offsets = [1, 0, 0], sizes = [16, 16, 4], strides = [1, 1, 1]} : vector<18x18x4xf32> to vector<16x16x4xf32>
    %9 = vector.shape_cast %8 : vector<16x16x4xf32> to vector<256x4xf32>
    %10 = vector.extract_strided_slice %1 {offsets = [1, 1, 0], sizes = [16, 16, 4], strides = [1, 1, 1]} : vector<18x18x4xf32> to vector<16x16x4xf32>
    %11 = vector.shape_cast %10 : vector<16x16x4xf32> to vector<256x4xf32>
    %12 = vector.extract_strided_slice %1 {offsets = [1, 2, 0], sizes = [16, 16, 4], strides = [1, 1, 1]} : vector<18x18x4xf32> to vector<16x16x4xf32>
    %13 = vector.shape_cast %12 : vector<16x16x4xf32> to vector<256x4xf32>
    %14 = vector.extract_strided_slice %1 {offsets = [2, 0, 0], sizes = [16, 16, 4], strides = [1, 1, 1]} : vector<18x18x4xf32> to vector<16x16x4xf32>
    %15 = vector.shape_cast %14 : vector<16x16x4xf32> to vector<256x4xf32>
    %16 = vector.extract_strided_slice %1 {offsets = [2, 1, 0], sizes = [16, 16, 4], strides = [1, 1, 1]} : vector<18x18x4xf32> to vector<16x16x4xf32>
    %17 = vector.shape_cast %16 : vector<16x16x4xf32> to vector<256x4xf32>
    %18 = vector.extract_strided_slice %1 {offsets = [2, 2, 0], sizes = [16, 16, 4], strides = [1, 1, 1]} : vector<18x18x4xf32> to vector<16x16x4xf32>
    %19 = vector.shape_cast %18 : vector<16x16x4xf32> to vector<256x4xf32>
    %20 = tpu.concatenate %3, %5, %7, %9, %11, %13, %15, %17, %19 in 1 : vector<256x4xf32>, vector<256x4xf32>, vector<256x4xf32>, vector<256x4xf32>, vector<256x4xf32>, vector<256x4xf32>, vector<256x4xf32>, vector<256x4xf32>, vector<256x4xf32> -> vector<256x36xf32>
    %c0_3 = arith.constant 0 : index
    %c0_4 = arith.constant 0 : index
    %21 = vector.load %arg2[%c0_3, %c0_4] : memref<36x32xf32, #tpu.memory_space<vmem>>, vector<36x32xf32>
    %cst = arith.constant dense<0.000000e+00> : vector<256x32xf32>
    %22 = tpu.matmul %20, %21, %cst {dimension_numbers = #tpu.dot_dimension_numbers<[1], [0], [0], [1], [0, 0, 1, 1], [], []>} : vector<256x36xf32>, vector<36x32xf32>, vector<256x32xf32> -> vector<256x32xf32>
    %c0_5 = arith.constant 0 : index
    %c0_6 = arith.constant 0 : index
    %23 = vector.load %arg3[%c0_5, %c0_6] : memref<1x32xf32, #tpu.memory_space<vmem>>, vector<1x32xf32>
    %24 = vector.broadcast %23 : vector<1x32xf32> to vector<256x32xf32>
    %25 = arith.addf %22, %24 : vector<256x32xf32>
    %cst_7 = arith.constant 0.000000e+00 : f32
    %26 = vector.broadcast %cst_7 : f32 to vector<256x32xf32>
    %27 = arith.maximumf %25, %26 : vector<256x32xf32>
    %c0_8 = arith.constant 0 : index
    %c0_9 = arith.constant 0 : index
    %28 = vector.load %arg4[%c0_8, %c0_9] : memref<32x21xf32, #tpu.memory_space<vmem>>, vector<32x21xf32>
    %cst_10 = arith.constant dense<0.000000e+00> : vector<256x21xf32>
    %29 = tpu.matmul %27, %28, %cst_10 {dimension_numbers = #tpu.dot_dimension_numbers<[1], [0], [0], [1], [0, 0, 1, 1], [], []>} : vector<256x32xf32>, vector<32x21xf32>, vector<256x21xf32> -> vector<256x21xf32>
    %c0_11 = arith.constant 0 : index
    %c0_12 = arith.constant 0 : index
    %30 = vector.load %arg5[%c0_11, %c0_12] : memref<1x21xf32, #tpu.memory_space<vmem>>, vector<1x21xf32>
    %31 = vector.broadcast %30 : vector<1x21xf32> to vector<256x21xf32>
    %32 = arith.addf %29, %31 : vector<256x21xf32>
    %33 = tpu.transpose %32, [1, 0] : vector<256x21xf32> -> vector<21x256xf32>
    %c0_13 = arith.constant 0 : index
    %c0_14 = arith.constant 0 : index
    %c0_15 = arith.constant 0 : index
    %34 = vector.load %arg6[%c0_13, %c0_14, %c0_15] : memref<1x21x256xf32, #tpu.memory_space<vmem>>, vector<1x21x256xf32>
    %35 = vector.shape_cast %34 : vector<1x21x256xf32> to vector<21x256xf32>
    %36 = vector.shape_cast %33 : vector<21x256xf32> to vector<1x21x256xf32>
    tpu.vector_store %arg6[%c0_13, %c0_14, %c0_15], %36 {strides = array<i32>} : memref<1x21x256xf32, #tpu.memory_space<vmem>>, vector<1x21x256xf32>,
    return
  }
  func.func @transform_0(%arg0: i32) -> (i32, i32, i32, i32) {
    %c0_i32 = arith.constant 0 : i32
    %c0_i32_0 = arith.constant 0 : i32
    %c0_i32_1 = arith.constant 0 : i32
    %c0_i32_2 = arith.constant 0 : i32
    return %arg0, %c0_i32, %c0_i32_0, %c0_i32_1 : i32, i32, i32, i32
  }
  func.func @transform_1(%arg0: i32) -> (i32, i32) {
    %c0_i32 = arith.constant 0 : i32
    %c0_i32_0 = arith.constant 0 : i32
    %c0_i32_1 = arith.constant 0 : i32
    return %c0_i32, %c0_i32_0 : i32, i32
  }
  func.func @transform_2(%arg0: i32) -> (i32, i32) {
    %c0_i32 = arith.constant 0 : i32
    %c0_i32_0 = arith.constant 0 : i32
    %c0_i32_1 = arith.constant 0 : i32
    return %c0_i32, %c0_i32_0 : i32, i32
  }
  func.func @transform_3(%arg0: i32) -> (i32, i32) {
    %c0_i32 = arith.constant 0 : i32
    %c0_i32_0 = arith.constant 0 : i32
    %c0_i32_1 = arith.constant 0 : i32
    return %c0_i32, %c0_i32_0 : i32, i32
  }
  func.func @transform_4(%arg0: i32) -> (i32, i32) {
    %c0_i32 = arith.constant 0 : i32
    %c0_i32_0 = arith.constant 0 : i32
    %c0_i32_1 = arith.constant 0 : i32
    return %c0_i32, %c0_i32_0 : i32, i32
  }
  func.func @transform_5(%arg0: i32) -> (i32, i32, i32) {
    %c0_i32 = arith.constant 0 : i32
    %c0_i32_0 = arith.constant 0 : i32
    %c0_i32_1 = arith.constant 0 : i32
    return %arg0, %c0_i32, %c0_i32_0 : i32, i32, i32
  }
}

</mosaic_0001>

<llo_original>
// kernel: segmentation_forward.1
$region0: #{segmentation_forward.1}
  #allocation0 [shape = 'u32[]', space=smem, size = 0x4, offset = 0x4, fixed_abs, tag = 'smem constant byte address 0x4 - core index']
  #allocation1 [shape = 'u32[72,128]{1,0:T(1,128)}', space=vmem, size = 0x9000, scoped, tag = 'internal scratch']
  %s0 = inlined_call_operand.vmem [shape: f32[2,18,18,4], index: 0, kind: input, shape index: {}]
  %s1 = inlined_call_operand.vmem [shape: f32[36,32], index: 1, kind: input, shape index: {}]
  %s2 = inlined_call_operand.vmem [shape: f32[1,32], index: 2, kind: input, shape index: {}]
  %s3 = inlined_call_operand.vmem [shape: f32[32,21], index: 3, kind: input, shape index: {}]
  %s4 = inlined_call_operand.vmem [shape: f32[1,21], index: 4, kind: input, shape index: {}]
  %s5 = inlined_call_operand.vmem [shape: f32[2,21,256], index: 5, kind: output, shape index: {}]
  %s6 = sld [smem:[#allocation0]]
  $region53: #{segmentation_forward.1} parent=0
    _
  %s8 = ssub.s32 1, %s6
  %s9 = scalar_select 0, %s8, %s6
  loop: start=0, step=1, limit=4
  $region2: #{segmentation_forward.1} parent=0 // loop_pre_header
    _
  $region3: #{segmentation_forward.1} parent=0 // loop_header
    %s11 = sphi 0, %s15
    %p12 = scmp.ge.s32.totalorder %s11, 4
    %s21 = sphi 0, %s23
    %s24 = sphi 0, %s21
    %s25 = sphi 0, %s24
    %s41 = sphi 0, %s25
    %s45 = sphi 0, %s45
    %s47 = sphi 0, %s45
    %s48 = sphi 0, %s47
    %s62 = sphi 0, %s48
    %s66 = sphi 0, %s66
    %s68 = sphi 0, %s66
    %s69 = sphi 0, %s68
    %s83 = sphi 0, %s69
    %s87 = sphi 0, %s87
    %s89 = sphi 0, %s87
    %s90 = sphi 0, %s89
    %s104 = sphi 0, %s90
    %s108 = sphi 0, %s108
    %s110 = sphi 0, %s108
    %s111 = sphi 0, %s110
    %s125 = sphi 0, %s111
    %s131 = sphi 0, %s133
    %s134 = sphi 0, %s131
    %s135 = sphi 0, %s134
    %s151 = sphi 0, %s135
  $region4: #{segmentation_forward.1} parent=0 // loop_header_branch
    %14 = sbr.rel (%p12) target = $region8
  $region5: #{segmentation_forward.1} parent=0 // loop_body
    %s16 = ssub.s32 %s11, 1
    %s17 = ssub.s32 %s11, 2
    %s18 = sadd.s32 %s11, 1
    %s19 = ssub.s32 %s11, %s18
    %p20 = scmp.eq.s32.totalorder %s19, 0
    %s22 = sadd.s32 %s21, 1
    %s23 = scalar_select %p20, %s21, %s22
    %p26 = pneg %p20
    %p27 = scmp.eq.s32.totalorder %s11, 1
    %p28 = por %p26, %p27
    %p29 = scmp.ne.s32.totalorder %s21, %s24
    %p30 = scmp.eq.s32.totalorder %s11, 0
    %p31 = por %p29, %p30
    %p32 = scmp.ne.s32.totalorder %s21, %s24
    %p33 = scmp.eq.s32.totalorder %s16, 1
    %p34 = por %p32, %p33
    %p35 = scmp.ne.s32.totalorder %s24, %s25
    %p36 = scmp.eq.s32.totalorder %s16, 0
    %p37 = por %p35, %p36
    %p38 = scmp.ne.s32.totalorder %s24, %s25
    %p39 = scmp.eq.s32.totalorder %s17, 1
    %p40 = por %p38, %p39
    %p42 = scmp.ne.s32.totalorder %s25, %s41
    %p43 = scmp.eq.s32.totalorder %s17, 0
    %p44 = por %p42, %p43
    %s46 = sadd.s32 %s45, 1
    %p49 = scmp.eq.s32.totalorder %s11, 1
    %p50 = scmp.ne.s32.totalorder %s45, %s47
    %p51 = scmp.eq.s32.totalorder %s11, 0
    %p52 = por %p50, %p51
    %p53 = scmp.ne.s32.totalorder %s45, %s47
    %p54 = scmp.eq.s32.totalorder %s16, 1
    %p55 = por %p53, %p54
    %p56 = scmp.ne.s32.totalorder %s47, %s48
    %p57 = scmp.eq.s32.totalorder %s16, 0
    %p58 = por %p56, %p57
    %p59 = scmp.ne.s32.totalorder %s47, %s48
    %p60 = scmp.eq.s32.totalorder %s17, 1
    %p61 = por %p59, %p60
    %p63 = scmp.ne.s32.totalorder %s48, %s62
    %p64 = scmp.eq.s32.totalorder %s17, 0
    %p65 = por %p63, %p64
    %s67 = sadd.s32 %s66, 1
    %p70 = scmp.eq.s32.totalorder %s11, 1
    %p71 = scmp.ne.s32.totalorder %s66, %s68
    %p72 = scmp.eq.s32.totalorder %s11, 0
    %p73 = por %p71, %p72
    %p74 = scmp.ne.s32.totalorder %s66, %s68
    %p75 = scmp.eq.s32.totalorder %s16, 1
    %p76 = por %p74, %p75
    %p77 = scmp.ne.s32.totalorder %s68, %s69
    %p78 = scmp.eq.s32.totalorder %s16, 0
    %p79 = por %p77, %p78
    %p80 = scmp.ne.s32.totalorder %s68, %s69
    %p81 = scmp.eq.s32.totalorder %s17, 1
    %p82 = por %p80, %p81
    %p84 = scmp.ne.s32.totalorder %s69, %s83
    %p85 = scmp.eq.s32.totalorder %s17, 0
    %p86 = por %p84, %p85
    %s88 = sadd.s32 %s87, 1
    %p91 = scmp.eq.s32.totalorder %s11, 1
    %p92 = scmp.ne.s32.totalorder %s87, %s89
    %p93 = scmp.eq.s32.totalorder %s11, 0
    %p94 = por %p92, %p93
    %p95 = scmp.ne.s32.totalorder %s87, %s89
    %p96 = scmp.eq.s32.totalorder %s16, 1
    %p97 = por %p95, %p96
    %p98 = scmp.ne.s32.totalorder %s89, %s90
    %p99 = scmp.eq.s32.totalorder %s16, 0
    %p100 = por %p98, %p99
    %p101 = scmp.ne.s32.totalorder %s89, %s90
    %p102 = scmp.eq.s32.totalorder %s17, 1
    %p103 = por %p101, %p102
    %p105 = scmp.ne.s32.totalorder %s90, %s104
    %p106 = scmp.eq.s32.totalorder %s17, 0
    %p107 = por %p105, %p106
    %s109 = sadd.s32 %s108, 1
    %p112 = scmp.eq.s32.totalorder %s11, 1
    %p113 = scmp.ne.s32.totalorder %s108, %s110
    %p114 = scmp.eq.s32.totalorder %s11, 0
    %p115 = por %p113, %p114
    %p116 = scmp.ne.s32.totalorder %s108, %s110
    %p117 = scmp.eq.s32.totalorder %s16, 1
    %p118 = por %p116, %p117
    %p119 = scmp.ne.s32.totalorder %s110, %s111
    %p120 = scmp.eq.s32.totalorder %s16, 0
    %p121 = por %p119, %p120
    %p122 = scmp.ne.s32.totalorder %s110, %s111
    %p123 = scmp.eq.s32.totalorder %s17, 1
    %p124 = por %p122, %p123
    %p126 = scmp.ne.s32.totalorder %s111, %s125
    %p127 = scmp.eq.s32.totalorder %s17, 0
    %p128 = por %p126, %p127
    %s129 = ssub.s32 %s11, %s18
    %p130 = scmp.eq.s32.totalorder %s129, 0
    %s132 = sadd.s32 %s131, 1
    %s133 = scalar_select %p130, %s131, %s132
    %p136 = pneg %p130
    %p137 = scmp.eq.s32.totalorder %s11, 1
    %p138 = por %p136, %p137
    %p139 = scmp.ne.s32.totalorder %s131, %s134
    %p140 = scmp.eq.s32.totalorder %s11, 0
    %p141 = por %p139, %p140
    %p142 = scmp.ne.s32.totalorder %s131, %s134
    %p143 = scmp.eq.s32.totalorder %s16, 1
    %p144 = por %p142, %p143
    %p145 = scmp.ne.s32.totalorder %s134, %s135
    %p146 = scmp.eq.s32.totalorder %s16, 0
    %p147 = por %p145, %p146
    %p148 = scmp.ne.s32.totalorder %s134, %s135
    %p149 = scmp.eq.s32.totalorder %s17, 1
    %p150 = por %p148, %p149
    %p152 = scmp.ne.s32.totalorder %s135, %s151
    %p153 = scmp.eq.s32.totalorder %s17, 0
    %p154 = por %p152, %p153
    %p155 = scmp.le.s32.totalorder 1, %s11
    %p156 = scmp.lt.s32.totalorder %s11, 3
    %p157 = pnand %p155, %p156
    %p158 = pneg %p157
    // Predicated region
    $region9: #{segmentation_forward.1} parent=5 // pred_check
      _
    $region10: #{segmentation_forward.1} parent=5 // pred_check_branch
      %160 = sbr.rel (%p157) target = $region12
    $region11: #{segmentation_forward.1} parent=5 // pred_region
      %s161 = ssub.s32 %s11, 1
      // Predicated region
      $region13: #{segmentation_forward.1} parent=11 // pred_check
        %p162 = pneg %p58
      $region14: #{segmentation_forward.1} parent=11 // pred_check_branch
        %164 = sbr.rel (%p162) target = $region16
      $region15: #{segmentation_forward.1} parent=11 // pred_region
        _
      $region16: #{segmentation_forward.1} parent=11 // pred_fallthru
        _
      // Predicated region
      $region17: #{segmentation_forward.1} parent=11 // pred_check
        %p165 = pneg %p79
      $region18: #{segmentation_forward.1} parent=11 // pred_check_branch
        %167 = sbr.rel (%p165) target = $region20
      $region19: #{segmentation_forward.1} parent=11 // pred_region
        _
      $region20: #{segmentation_forward.1} parent=11 // pred_fallthru
        _
      // Predicated region
      $region21: #{segmentation_forward.1} parent=11 // pred_check
        %p168 = pneg %p100
      $region22: #{segmentation_forward.1} parent=11 // pred_check_branch
        %170 = sbr.rel (%p168) target = $region24
      $region23: #{segmentation_forward.1} parent=11 // pred_region
        _
      $region24: #{segmentation_forward.1} parent=11 // pred_fallthru
        _
      // Predicated region
      $region25: #{segmentation_forward.1} parent=11 // pred_check
        %p171 = pneg %p121
      $region26: #{segmentation_forward.1} parent=11 // pred_check_branch
        %173 = sbr.rel (%p171) target = $region28
      $region27: #{segmentation_forward.1} parent=11 // pred_region
        _
      $region28: #{segmentation_forward.1} parent=11 // pred_fallthru
        _
    $region12: #{segmentation_forward.1} parent=5 // pred_fallthru
      _
    %p174 = scmp.lt.s32.totalorder %s11, 2
    // Predicated region
    $region29: #{segmentation_forward.1} parent=5 // pred_check
      %p175 = pneg %p174
    $region30: #{segmentation_forward.1} parent=5 // pred_check_branch
      %177 = sbr.rel (%p175) target = $region32
    $region31: #{segmentation_forward.1} parent=5 // pred_region
      // Predicated region
      $region33: #{segmentation_forward.1} parent=31 // pred_check
        %p178 = pneg %p31
      $region34: #{segmentation_forward.1} parent=31 // pred_check_branch
        %180 = sbr.rel (%p178) target = $region36
      $region35: #{segmentation_forward.1} parent=31 // pred_region
        %p181 = scmp.lt.s32.totalorder %s11, 1
        %s182 = scalar_select %p181, %s11, 1
        %s183 = smul.addr %s182, 54
        %s184 = smul.addr %s183, 8
        %s185 = scalar_lea.vmem %s0, %s184
      $region36: #{segmentation_forward.1} parent=31 // pred_fallthru
        _
    $region32: #{segmentation_forward.1} parent=5 // pred_fallthru
      _
    %p186 = scmp.le.s32.totalorder 1, %s11
    %p187 = scmp.lt.s32.totalorder %s11, 3
    %p188 = pnand %p186, %p187
    %p189 = pneg %p188
    // Predicated region
    $region37: #{segmentation_forward.1} parent=5 // pred_check
      _
    $region38: #{segmentation_forward.1} parent=5 // pred_check_branch
      %191 = sbr.rel (%p188) target = $region40
    $region39: #{segmentation_forward.1} parent=5 // pred_region
      %s192 = ssub.s32 %s11, 1
      %p193 = scmp.lt.s32.totalorder %s16, 1
      %s194 = scalar_select %p193, %s16, 1
      %s195 = smul.addr %s194, 54
      %s196 = smul.addr %s195, 8
      %s197 = scalar_lea.vmem %s0, %s196
      %p198 = pneg %p37
      %p199 = pneg %p34
      %p200 = pneg %p58
      %p201 = pneg %p55
      %p202 = pneg %p79
      %p203 = pneg %p76
      %p204 = pneg %p100
      %p205 = pneg %p97
      %p206 = pneg %p121
      %p207 = pneg %p118
      %p208 = pneg %p147
      %p209 = pneg %p144
      %p210 = scmp.lt.s32.totalorder %s16, 1
      %s211 = scalar_select %p210, %s16, 1
      %s212 = smul.addr %s211, 6
      %s213 = smul.addr %s212, 8
      %s214 = scalar_lea.vmem %s5, %s213
      %p215 = scmp.lt.s32.totalorder %s16, 1
      %s216 = scalar_select %p215, %s16, 1
      %s217 = smul.addr %s216, 54
      %s218 = smul.addr %s217, 8
      %s219 = scalar_lea.vmem %s0, %s218
      %p220 = scmp.lt.s32.totalorder %s16, 1
      %s221 = scalar_select %p220, %s16, 1
      %s222 = smul.addr %s221, 6
      %s223 = smul.addr %s222, 8
      %s224 = scalar_lea.vmem %s5, %s223
      %v225 = vld [vmem:[%s219] sm:$0xff]
      %v226 = vld [vmem:[%s219 + $0x8] sm:$0xff]
      %v227 = vld [vmem:[%s219 + $0x10] sm:$0x3]
      %v228 = vld [vmem:[%s219 + $0x18] sm:$0xff]
      %v229 = vld [vmem:[%s219 + $0x20] sm:$0xff]
      %v230 = vld [vmem:[%s219 + $0x28] sm:$0x3]
      %v231 = vld [vmem:[%s219 + $0x30] sm:$0xff]
      %v232 = vld [vmem:[%s219 + $0x38] sm:$0xff]
      %v233 = vld [vmem:[%s219 + $0x40] sm:$0x3]
      %v234 = vld [vmem:[%s219 + $0x48] sm:$0xff]
      %v235 = vld [vmem:[%s219 + $0x50] sm:$0xff]
      %v236 = vld [vmem:[%s219 + $0x58] sm:$0x3]
      %v237 = vld [vmem:[%s219 + $0x60] sm:$0xff]
      %v238 = vld [vmem:[%s219 + $0x68] sm:$0xff]
      %v239 = vld [vmem:[%s219 + $0x70] sm:$0x3]
      %v240 = vld [vmem:[%s219 + $0x78] sm:$0xff]
      %v241 = vld [vmem:[%s219 + $0x80] sm:$0xff]
      %v242 = vld [vmem:[%s219 + $0x88] sm:$0x3]
      %v243 = vld [vmem:[%s219 + $0x90] sm:$0xff]
      %v244 = vld [vmem:[%s219 + $0x98] sm:$0xff]
      %v245 = vld [vmem:[%s219 + $0xa0] sm:$0x3]
      %v246 = vld [vmem:[%s219 + $0xa8] sm:$0xff]
      %v247 = vld [vmem:[%s219 + $0xb0] sm:$0xff]
      %v248 = vld [vmem:[%s219 + $0xb8] sm:$0x3]
      %v249 = vld [vmem:[%s219 + $0xc0] sm:$0xff]
      %v250 = vld [vmem:[%s219 + $0xc8] sm:$0xff]
      %v251 = vld [vmem:[%s219 + $0xd0] sm:$0x3]
      %v252 = vld [vmem:[%s219 + $0xd8] sm:$0xff]
      %v253 = vld [vmem:[%s219 + $0xe0] sm:$0xff]
      %v254 = vld [vmem:[%s219 + $0xe8] sm:$0x3]
      %v255 = vld [vmem:[%s219 + $0xf0] sm:$0xff]
      %v256 = vld [vmem:[%s219 + $0xf8] sm:$0xff]
      %v257 = vld [vmem:[%s219 + $0x100] sm:$0x3]
      %v258 = vld [vmem:[%s219 + $0x108] sm:$0xff]
      %v259 = vld [vmem:[%s219 + $0x110] sm:$0xff]
      %v260 = vld [vmem:[%s219 + $0x118] sm:$0x3]
      %v261 = vld [vmem:[%s219 + $0x120] sm:$0xff]
      %v262 = vld [vmem:[%s219 + $0x128] sm:$0xff]
      %v263 = vld [vmem:[%s219 + $0x130] sm:$0x3]
      %v264 = vld [vmem:[%s219 + $0x138] sm:$0xff]
      %v265 = vld [vmem:[%s219 + $0x140] sm:$0xff]
      %v266 = vld [vmem:[%s219 + $0x148] sm:$0x3]
      %v267 = vld [vmem:[%s219 + $0x150] sm:$0xff]
      %v268 = vld [vmem:[%s219 + $0x158] sm:$0xff]
      %v269 = vld [vmem:[%s219 + $0x160] sm:$0x3]
      %v270 = vld [vmem:[%s219 + $0x168] sm:$0xff]
      %v271 = vld [vmem:[%s219 + $0x170] sm:$0xff]
      %v272 = vld [vmem:[%s219 + $0x178] sm:$0x3]
      %v273 = vld [vmem:[%s219 + $0x180] sm:$0xff]
      %v274 = vld [vmem:[%s219 + $0x188] sm:$0xff]
      %v275 = vld [vmem:[%s219 + $0x190] sm:$0x3]
      %v276 = vld [vmem:[%s219 + $0x198] sm:$0xff]
      %v277 = vld [vmem:[%s219 + $0x1a0] sm:$0xff]
      %v278 = vld [vmem:[%s219 + $0x1a8] sm:$0x3]
      %vm327 = vcmask 1046528
      %v328 = vrot.slane %v225, 1
      %v329 = vrot.slane %v226, 1
      %v330 = vsel %vm327, %v328, %v329
      %v331 = vrot.slane %v227, 1
      %v332 = vsel %vm327, %v329, %v331
      %v333 = vrot.slane %v228, 1
      %v334 = vrot.slane %v229, 1
      %v335 = vsel %vm327, %v333, %v334
      %v336 = vrot.slane %v230, 1
      %v337 = vsel %vm327, %v334, %v336
      %v338 = vrot.slane %v231, 1
      %v339 = vrot.slane %v232, 1
      %v340 = vsel %vm327, %v338, %v339
      %v341 = vrot.slane %v233, 1
      %v342 = vsel %vm327, %v339, %v341
      %v343 = vrot.slane %v234, 1
      %v344 = vrot.slane %v235, 1
      %v345 = vsel %vm327, %v343, %v344
      %v346 = vrot.slane %v236, 1
      %v347 = vsel %vm327, %v344, %v346
      %v348 = vrot.slane %v237, 1
      %v349 = vrot.slane %v238, 1
      %v350 = vsel %vm327, %v348, %v349
      %v351 = vrot.slane %v239, 1
      %v352 = vsel %vm327, %v349, %v351
      %v353 = vrot.slane %v240, 1
      %v354 = vrot.slane %v241, 1
      %v355 = vsel %vm327, %v353, %v354
      %v356 = vrot.slane %v242, 1
      %v357 = vsel %vm327, %v354, %v356
      %v358 = vrot.slane %v243, 1
      %v359 = vrot.slane %v244, 1
      %v360 = vsel %vm327, %v358, %v359
      %v361 = vrot.slane %v245, 1
      %v362 = vsel %vm327, %v359, %v361
      %v363 = vrot.slane %v246, 1
      %v364 = vrot.slane %v247, 1
      %v365 = vsel %vm327, %v363, %v364
      %v366 = vrot.slane %v248, 1
      %v367 = vsel %vm327, %v364, %v366
      %v368 = vrot.slane %v249, 1
      %v369 = vrot.slane %v250, 1
      %v370 = vsel %vm327, %v368, %v369
      %v371 = vrot.slane %v251, 1
      %v372 = vsel %vm327, %v369, %v371
      %v373 = vrot.slane %v252, 1
      %v374 = vrot.slane %v253, 1
      %v375 = vsel %vm327, %v373, %v374
      %v376 = vrot.slane %v254, 1
      %v377 = vsel %vm327, %v374, %v376
      %v378 = vrot.slane %v255, 1
      %v379 = vrot.slane %v256, 1
      %v380 = vsel %vm327, %v378, %v379
      %v381 = vrot.slane %v257, 1
      %v382 = vsel %vm327, %v379, %v381
      %v383 = vrot.slane %v258, 1
      %v384 = vrot.slane %v259, 1
      %v385 = vsel %vm327, %v383, %v384
      %v386 = vrot.slane %v260, 1
      %v387 = vsel %vm327, %v384, %v386
      %v388 = vrot.slane %v261, 1
      %v389 = vrot.slane %v262, 1
      %v390 = vsel %vm327, %v388, %v389
      %v391 = vrot.slane %v263, 1
      %v392 = vsel %vm327, %v389, %v391
      %v393 = vrot.slane %v264, 1
      %v394 = vrot.slane %v265, 1
      %v395 = vsel %vm327, %v393, %v394
      %v396 = vrot.slane %v266, 1
      %v397 = vsel %vm327, %v394, %v396
      %v398 = vrot.slane %v267, 1
      %v399 = vrot.slane %v268, 1
      %v400 = vsel %vm327, %v398, %v399
      %v401 = vrot.slane %v269, 1
      %v402 = vsel %vm327, %v399, %v401
      %v403 = vrot.slane %v270, 1
      %v404 = vrot.slane %v271, 1
      %v405 = vsel %vm327, %v403, %v404
      %v406 = vrot.slane %v272, 1
      %v407 = vsel %vm327, %v404, %v406
      %vm408 = vcmask 1045504
      %v409 = vrot.slane %v225, 2
      %v410 = vrot.slane %v226, 2
      %v411 = vsel %vm408, %v409, %v410
      %v412 = vrot.slane %v227, 2
      %v413 = vsel %vm408, %v410, %v412
      %v414 = vrot.slane %v228, 2
      %v415 = vrot.slane %v229, 2
      %v416 = vsel %vm408, %v414, %v415
      %v417 = vrot.slane %v230, 2
      %v418 = vsel %vm408, %v415, %v417
      %v419 = vrot.slane %v231, 2
      %v420 = vrot.slane %v232, 2
      %v421 = vsel %vm408, %v419, %v420
      %v422 = vrot.slane %v233, 2
      %v423 = vsel %vm408, %v420, %v422
      %v424 = vrot.slane %v234, 2
      %v425 = vrot.slane %v235, 2
      %v426 = vsel %vm408, %v424, %v425
      %v427 = vrot.slane %v236, 2
      %v428 = vsel %vm408, %v425, %v427
      %v429 = vrot.slane %v237, 2
      %v430 = vrot.slane %v238, 2
      %v431 = vsel %vm408, %v429, %v430
      %v432 = vrot.slane %v239, 2
      %v433 = vsel %vm408, %v430, %v432
      %v434 = vrot.slane %v240, 2
      %v435 = vrot.slane %v241, 2
      %v436 = vsel %vm408, %v434, %v435
      %v437 = vrot.slane %v242, 2
      %v438 = vsel %vm408, %v435, %v437
      %v439 = vrot.slane %v243, 2
      %v440 = vrot.slane %v244, 2
      %v441 = vsel %vm408, %v439, %v440
      %v442 = vrot.slane %v245, 2
      %v443 = vsel %vm408, %v440, %v442
      %v444 = vrot.slane %v246, 2
      %v445 = vrot.slane %v247, 2
      %v446 = vsel %vm408, %v444, %v445
      %v447 = vrot.slane %v248, 2
      %v448 = vsel %vm408, %v445, %v447
      %v449 = vrot.slane %v249, 2
      %v450 = vrot.slane %v250, 2
      %v451 = vsel %vm408, %v449, %v450
      %v452 = vrot.slane %v251, 2
      %v453 = vsel %vm408, %v450, %v452
      %v454 = vrot.slane %v252, 2
      %v455 = vrot.slane %v253, 2
      %v456 = vsel %vm408, %v454, %v455
      %v457 = vrot.slane %v254, 2
      %v458 = vsel %vm408, %v455, %v457
      %v459 = vrot.slane %v255, 2
      %v460 = vrot.slane %v256, 2
      %v461 = vsel %vm408, %v459, %v460
      %v462 = vrot.slane %v257, 2
      %v463 = vsel %vm408, %v460, %v462
      %v464 = vrot.slane %v258, 2
      %v465 = vrot.slane %v259, 2
      %v466 = vsel %vm408, %v464, %v465
      %v467 = vrot.slane %v260, 2
      %v468 = vsel %vm408, %v465, %v467
      %v469 = vrot.slane %v261, 2
      %v470 = vrot.slane %v262, 2
      %v471 = vsel %vm408, %v469, %v470
      %v472 = vrot.slane %v263, 2
      %v473 = vsel %vm408, %v470, %v472
      %v474 = vrot.slane %v264, 2
      %v475 = vrot.slane %v265, 2
      %v476 = vsel %vm408, %v474, %v475
      %v477 = vrot.slane %v266, 2
      %v478 = vsel %vm408, %v475, %v477
      %v479 = vrot.slane %v267, 2
      %v480 = vrot.slane %v268, 2
      %v481 = vsel %vm408, %v479, %v480
      %v482 = vrot.slane %v269, 2
      %v483 = vsel %vm408, %v480, %v482
      %v484 = vrot.slane %v270, 2
      %v485 = vrot.slane %v271, 2
      %v486 = vsel %vm408, %v484, %v485
      %v487 = vrot.slane %v272, 2
      %v488 = vsel %vm408, %v485, %v487
      %v492 = vrot.slane %v273, 1
      %v493 = vrot.slane %v274, 1
      %v494 = vsel %vm327, %v492, %v493
      %v495 = vrot.slane %v275, 1
      %v496 = vsel %vm327, %v493, %v495
      %v497 = vrot.slane %v273, 2
      %v498 = vrot.slane %v274, 2
      %v499 = vsel %vm408, %v497, %v498
      %v500 = vrot.slane %v275, 2
      %v501 = vsel %vm408, %v498, %v500
      %v505 = vrot.slane %v276, 1
      %v506 = vrot.slane %v277, 1
      %v507 = vsel %vm327, %v505, %v506
      %v508 = vrot.slane %v278, 1
      %v509 = vsel %vm327, %v506, %v508
      %v510 = vrot.slane %v276, 2
      %v511 = vrot.slane %v277, 2
      %v512 = vsel %vm408, %v510, %v511
      %v513 = vrot.slane %v278, 2
      %v514 = vsel %vm408, %v511, %v513
      %515 = vrot.lane.b32.xlu0 %v330, 4
      %v516 = vpop.permute.xlu0 %515
      %517 = vrot.lane.b32.xlu0 %v332, 4
      %v518 = vpop.permute.xlu0 %517
      %519 = vrot.lane.b32.xlu0 %v335, 4
      %v520 = vpop.permute.xlu0 %519
      %521 = vrot.lane.b32.xlu0 %v337, 4
      %v522 = vpop.permute.xlu0 %521
      %523 = vrot.lane.b32.xlu0 %v340, 4
      %v524 = vpop.permute.xlu0 %523
      %525 = vrot.lane.b32.xlu0 %v342, 4
      %v526 = vpop.permute.xlu0 %525
      %527 = vrot.lane.b32.xlu0 %v345, 4
      %v528 = vpop.permute.xlu0 %527
      %529 = vrot.lane.b32.xlu0 %v347, 4
      %v530 = vpop.permute.xlu0 %529
      %531 = vrot.lane.b32.xlu0 %v350, 4
      %v532 = vpop.permute.xlu0 %531
      %533 = vrot.lane.b32.xlu0 %v352, 4
      %v534 = vpop.permute.xlu0 %533
      %535 = vrot.lane.b32.xlu0 %v355, 4
      %v536 = vpop.permute.xlu0 %535
      %537 = vrot.lane.b32.xlu0 %v357, 4
      %v538 = vpop.permute.xlu0 %537
      %539 = vrot.lane.b32.xlu0 %v360, 4
      %v540 = vpop.permute.xlu0 %539
      %541 = vrot.lane.b32.xlu0 %v362, 4
      %v542 = vpop.permute.xlu0 %541
      %543 = vrot.lane.b32.xlu0 %v365, 4
      %v544 = vpop.permute.xlu0 %543
      %545 = vrot.lane.b32.xlu0 %v367, 4
      %v546 = vpop.permute.xlu0 %545
      %547 = vrot.lane.b32.xlu0 %v370, 4
      %v548 = vpop.permute.xlu0 %547
      %549 = vrot.lane.b32.xlu0 %v372, 4
      %v550 = vpop.permute.xlu0 %549
      %551 = vrot.lane.b32.xlu0 %v375, 4
      %v552 = vpop.permute.xlu0 %551
      %553 = vrot.lane.b32.xlu0 %v377, 4
      %v554 = vpop.permute.xlu0 %553
      %555 = vrot.lane.b32.xlu0 %v380, 4
      %v556 = vpop.permute.xlu0 %555
      %557 = vrot.lane.b32.xlu0 %v382, 4
      %v558 = vpop.permute.xlu0 %557
      %559 = vrot.lane.b32.xlu0 %v385, 4
      %v560 = vpop.permute.xlu0 %559
      %561 = vrot.lane.b32.xlu0 %v387, 4
      %v562 = vpop.permute.xlu0 %561
      %563 = vrot.lane.b32.xlu0 %v390, 4
      %v564 = vpop.permute.xlu0 %563
      %565 = vrot.lane.b32.xlu0 %v392, 4
      %v566 = vpop.permute.xlu0 %565
      %567 = vrot.lane.b32.xlu0 %v395, 4
      %v568 = vpop.permute.xlu0 %567
      %569 = vrot.lane.b32.xlu0 %v397, 4
      %v570 = vpop.permute.xlu0 %569
      %571 = vrot.lane.b32.xlu0 %v400, 4
      %v572 = vpop.permute.xlu0 %571
      %573 = vrot.lane.b32.xlu0 %v402, 4
      %v574 = vpop.permute.xlu0 %573
      %575 = vrot.lane.b32.xlu0 %v405, 4
      %v576 = vpop.permute.xlu0 %575
      %577 = vrot.lane.b32.xlu0 %v407, 4
      %v578 = vpop.permute.xlu0 %577
      %611 = vrot.lane.b32.xlu0 %v411, 8
      %v612 = vpop.permute.xlu0 %611
      %613 = vrot.lane.b32.xlu0 %v413, 8
      %v614 = vpop.permute.xlu0 %613
      %615 = vrot.lane.b32.xlu0 %v416, 8
      %v616 = vpop.permute.xlu0 %615
      %617 = vrot.lane.b32.xlu0 %v418, 8
      %v618 = vpop.permute.xlu0 %617
      %619 = vrot.lane.b32.xlu0 %v421, 8
      %v620 = vpop.permute.xlu0 %619
      %621 = vrot.lane.b32.xlu0 %v423, 8
      %v622 = vpop.permute.xlu0 %621
      %623 = vrot.lane.b32.xlu0 %v426, 8
      %v624 = vpop.permute.xlu0 %623
      %625 = vrot.lane.b32.xlu0 %v428, 8
      %v626 = vpop.permute.xlu0 %625
      %627 = vrot.lane.b32.xlu0 %v431, 8
      %v628 = vpop.permute.xlu0 %627
      %629 = vrot.lane.b32.xlu0 %v433, 8
      %v630 = vpop.permute.xlu0 %629
      %631 = vrot.lane.b32.xlu0 %v436, 8
      %v632 = vpop.permute.xlu0 %631
      %633 = vrot.lane.b32.xlu0 %v438, 8
      %v634 = vpop.permute.xlu0 %633
      %635 = vrot.lane.b32.xlu0 %v441, 8
      %v636 = vpop.permute.xlu0 %635
      %637 = vrot.lane.b32.xlu0 %v443, 8
      %v638 = vpop.permute.xlu0 %637
      %639 = vrot.lane.b32.xlu0 %v446, 8
      %v640 = vpop.permute.xlu0 %639
      %641 = vrot.lane.b32.xlu0 %v448, 8
      %v642 = vpop.permute.xlu0 %641
      %643 = vrot.lane.b32.xlu0 %v451, 8
      %v644 = vpop.permute.xlu0 %643
      %645 = vrot.lane.b32.xlu0 %v453, 8
      %v646 = vpop.permute.xlu0 %645
      %647 = vrot.lane.b32.xlu0 %v456, 8
      %v648 = vpop.permute.xlu0 %647
      %649 = vrot.lane.b32.xlu0 %v458, 8
      %v650 = vpop.permute.xlu0 %649
      %651 = vrot.lane.b32.xlu0 %v461, 8
      %v652 = vpop.permute.xlu0 %651
      %653 = vrot.lane.b32.xlu0 %v463, 8
      %v654 = vpop.permute.xlu0 %653
      %655 = vrot.lane.b32.xlu0 %v466, 8
      %v656 = vpop.permute.xlu0 %655
      %657 = vrot.lane.b32.xlu0 %v468, 8
      %v658 = vpop.permute.xlu0 %657
      %659 = vrot.lane.b32.xlu0 %v471, 8
      %v660 = vpop.permute.xlu0 %659
      %661 = vrot.lane.b32.xlu0 %v473, 8
      %v662 = vpop.permute.xlu0 %661
      %663 = vrot.lane.b32.xlu0 %v476, 8
      %v664 = vpop.permute.xlu0 %663
      %665 = vrot.lane.b32.xlu0 %v478, 8
      %v666 = vpop.permute.xlu0 %665
      %667 = vrot.lane.b32.xlu0 %v481, 8
      %v668 = vpop.permute.xlu0 %667
      %669 = vrot.lane.b32.xlu0 %v483, 8
      %v670 = vpop.permute.xlu0 %669
      %671 = vrot.lane.b32.xlu0 %v486, 8
      %v672 = vpop.permute.xlu0 %671
      %673 = vrot.lane.b32.xlu0 %v488, 8
      %v674 = vpop.permute.xlu0 %673
      %707 = vrot.lane.b32.xlu0 %v228, 12
      %v708 = vpop.permute.xlu0 %707
      %709 = vrot.lane.b32.xlu0 %v229, 12
      %v710 = vpop.permute.xlu0 %709
      %711 = vrot.lane.b32.xlu0 %v231, 12
      %v712 = vpop.permute.xlu0 %711
      %713 = vrot.lane.b32.xlu0 %v232, 12
      %v714 = vpop.permute.xlu0 %713
      %715 = vrot.lane.b32.xlu0 %v234, 12
      %v716 = vpop.permute.xlu0 %715
      %717 = vrot.lane.b32.xlu0 %v235, 12
      %v718 = vpop.permute.xlu0 %717
      %719 = vrot.lane.b32.xlu0 %v237, 12
      %v720 = vpop.permute.xlu0 %719
      %721 = vrot.lane.b32.xlu0 %v238, 12
      %v722 = vpop.permute.xlu0 %721
      %723 = vrot.lane.b32.xlu0 %v240, 12
      %v724 = vpop.permute.xlu0 %723
      %725 = vrot.lane.b32.xlu0 %v241, 12
      %v726 = vpop.permute.xlu0 %725
      %727 = vrot.lane.b32.xlu0 %v243, 12
      %v728 = vpop.permute.xlu0 %727
      %729 = vrot.lane.b32.xlu0 %v244, 12
      %v730 = vpop.permute.xlu0 %729
      %731 = vrot.lane.b32.xlu0 %v246, 12
      %v732 = vpop.permute.xlu0 %731
      %733 = vrot.lane.b32.xlu0 %v247, 12
      %v734 = vpop.permute.xlu0 %733
      %735 = vrot.lane.b32.xlu0 %v249, 12
      %v736 = vpop.permute.xlu0 %735
      %737 = vrot.lane.b32.xlu0 %v250, 12
      %v738 = vpop.permute.xlu0 %737
      %739 = vrot.lane.b32.xlu0 %v252, 12
      %v740 = vpop.permute.xlu0 %739
      %741 = vrot.lane.b32.xlu0 %v253, 12
      %v742 = vpop.permute.xlu0 %741
      %743 = vrot.lane.b32.xlu0 %v255, 12
      %v744 = vpop.permute.xlu0 %743
      %745 = vrot.lane.b32.xlu0 %v256, 12
      %v746 = vpop.permute.xlu0 %745
      %747 = vrot.lane.b32.xlu0 %v258, 12
      %v748 = vpop.permute.xlu0 %747
      %749 = vrot.lane.b32.xlu0 %v259, 12
      %v750 = vpop.permute.xlu0 %749
      %751 = vrot.lane.b32.xlu0 %v261, 12
      %v752 = vpop.permute.xlu0 %751
      %753 = vrot.lane.b32.xlu0 %v262, 12
      %v754 = vpop.permute.xlu0 %753
      %755 = vrot.lane.b32.xlu0 %v264, 12
      %v756 = vpop.permute.xlu0 %755
      %757 = vrot.lane.b32.xlu0 %v265, 12
      %v758 = vpop.permute.xlu0 %757
      %759 = vrot.lane.b32.xlu0 %v267, 12
      %v760 = vpop.permute.xlu0 %759
      %761 = vrot.lane.b32.xlu0 %v268, 12
      %v762 = vpop.permute.xlu0 %761
      %763 = vrot.lane.b32.xlu0 %v270, 12
      %v764 = vpop.permute.xlu0 %763
      %765 = vrot.lane.b32.xlu0 %v271, 12
      %v766 = vpop.permute.xlu0 %765
      %767 = vrot.lane.b32.xlu0 %v273, 12
      %v768 = vpop.permute.xlu0 %767
      %769 = vrot.lane.b32.xlu0 %v274, 12
      %v770 = vpop.permute.xlu0 %769
      %803 = vrot.lane.b32.xlu0 %v335, 16
      %v804 = vpop.permute.xlu0 %803
      %805 = vrot.lane.b32.xlu0 %v337, 16
      %v806 = vpop.permute.xlu0 %805
      %807 = vrot.lane.b32.xlu0 %v340, 16
      %v808 = vpop.permute.xlu0 %807
      %809 = vrot.lane.b32.xlu0 %v342, 16
      %v810 = vpop.permute.xlu0 %809
      %811 = vrot.lane.b32.xlu0 %v345, 16
      %v812 = vpop.permute.xlu0 %811
      %813 = vrot.lane.b32.xlu0 %v347, 16
      %v814 = vpop.permute.xlu0 %813
      %815 = vrot.lane.b32.xlu0 %v350, 16
      %v816 = vpop.permute.xlu0 %815
      %817 = vrot.lane.b32.xlu0 %v352, 16
      %v818 = vpop.permute.xlu0 %817
      %819 = vrot.lane.b32.xlu0 %v355, 16
      %v820 = vpop.permute.xlu0 %819
      %821 = vrot.lane.b32.xlu0 %v357, 16
      %v822 = vpop.permute.xlu0 %821
      %823 = vrot.lane.b32.xlu0 %v360, 16
      %v824 = vpop.permute.xlu0 %823
      %825 = vrot.lane.b32.xlu0 %v362, 16
      %v826 = vpop.permute.xlu0 %825
      %827 = vrot.lane.b32.xlu0 %v365, 16
      %v828 = vpop.permute.xlu0 %827
      %829 = vrot.lane.b32.xlu0 %v367, 16
      %v830 = vpop.permute.xlu0 %829
      %831 = vrot.lane.b32.xlu0 %v370, 16
      %v832 = vpop.permute.xlu0 %831
      %833 = vrot.lane.b32.xlu0 %v372, 16
      %v834 = vpop.permute.xlu0 %833
      %835 = vrot.lane.b32.xlu0 %v375, 16
      %v836 = vpop.permute.xlu0 %835
      %837 = vrot.lane.b32.xlu0 %v377, 16
      %v838 = vpop.permute.xlu0 %837
      %839 = vrot.lane.b32.xlu0 %v380, 16
      %v840 = vpop.permute.xlu0 %839
      %841 = vrot.lane.b32.xlu0 %v382, 16
      %v842 = vpop.permute.xlu0 %841
      %843 = vrot.lane.b32.xlu0 %v385, 16
      %v844 = vpop.permute.xlu0 %843
      %845 = vrot.lane.b32.xlu0 %v387, 16
      %v846 = vpop.permute.xlu0 %845
      %847 = vrot.lane.b32.xlu0 %v390, 16
      %v848 = vpop.permute.xlu0 %847
      %849 = vrot.lane.b32.xlu0 %v392, 16
      %v850 = vpop.permute.xlu0 %849
      %851 = vrot.lane.b32.xlu0 %v395, 16
      %v852 = vpop.permute.xlu0 %851
      %853 = vrot.lane.b32.xlu0 %v397, 16
      %v854 = vpop.permute.xlu0 %853
      %855 = vrot.lane.b32.xlu0 %v400, 16
      %v856 = vpop.permute.xlu0 %855
      %857 = vrot.lane.b32.xlu0 %v402, 16
      %v858 = vpop.permute.xlu0 %857
      %859 = vrot.lane.b32.xlu0 %v405, 16
      %v860 = vpop.permute.xlu0 %859
      %861 = vrot.lane.b32.xlu0 %v407, 16
      %v862 = vpop.permute.xlu0 %861
      %863 = vrot.lane.b32.xlu0 %v494, 16
      %v864 = vpop.permute.xlu0 %863
      %865 = vrot.lane.b32.xlu0 %v496, 16
      %v866 = vpop.permute.xlu0 %865
      %899 = vrot.lane.b32.xlu0 %v416, 20
      %v900 = vpop.permute.xlu0 %899
      %901 = vrot.lane.b32.xlu0 %v418, 20
      %v902 = vpop.permute.xlu0 %901
      %903 = vrot.lane.b32.xlu0 %v421, 20
      %v904 = vpop.permute.xlu0 %903
      %905 = vrot.lane.b32.xlu0 %v423, 20
      %v906 = vpop.permute.xlu0 %905
      %907 = vrot.lane.b32.xlu0 %v426, 20
      %v908 = vpop.permute.xlu0 %907
      %909 = vrot.lane.b32.xlu0 %v428, 20
      %v910 = vpop.permute.xlu0 %909
      %911 = vrot.lane.b32.xlu0 %v431, 20
      %v912 = vpop.permute.xlu0 %911
      %913 = vrot.lane.b32.xlu0 %v433, 20
      %v914 = vpop.permute.xlu0 %913
      %915 = vrot.lane.b32.xlu0 %v436, 20
      %v916 = vpop.permute.xlu0 %915
      %917 = vrot.lane.b32.xlu0 %v438, 20
      %v918 = vpop.permute.xlu0 %917
      %919 = vrot.lane.b32.xlu0 %v441, 20
      %v920 = vpop.permute.xlu0 %919
      %921 = vrot.lane.b32.xlu0 %v443, 20
      %v922 = vpop.permute.xlu0 %921
      %923 = vrot.lane.b32.xlu0 %v446, 20
      %v924 = vpop.permute.xlu0 %923
      %925 = vrot.lane.b32.xlu0 %v448, 20
      %v926 = vpop.permute.xlu0 %925
      %927 = vrot.lane.b32.xlu0 %v451, 20
      %v928 = vpop.permute.xlu0 %927
      %929 = vrot.lane.b32.xlu0 %v453, 20
      %v930 = vpop.permute.xlu0 %929
      %931 = vrot.lane.b32.xlu0 %v456, 20
      %v932 = vpop.permute.xlu0 %931
      %933 = vrot.lane.b32.xlu0 %v458, 20
      %v934 = vpop.permute.xlu0 %933
      %935 = vrot.lane.b32.xlu0 %v461, 20
      %v936 = vpop.permute.xlu0 %935
      %937 = vrot.lane.b32.xlu0 %v463, 20
      %v938 = vpop.permute.xlu0 %937
      %939 = vrot.lane.b32.xlu0 %v466, 20
      %v940 = vpop.permute.xlu0 %939
      %941 = vrot.lane.b32.xlu0 %v468, 20
      %v942 = vpop.permute.xlu0 %941
      %943 = vrot.lane.b32.xlu0 %v471, 20
      %v944 = vpop.permute.xlu0 %943
      %945 = vrot.lane.b32.xlu0 %v473, 20
      %v946 = vpop.permute.xlu0 %945
      %947 = vrot.lane.b32.xlu0 %v476, 20
      %v948 = vpop.permute.xlu0 %947
      %949 = vrot.lane.b32.xlu0 %v478, 20
      %v950 = vpop.permute.xlu0 %949
      %951 = vrot.lane.b32.xlu0 %v481, 20
      %v952 = vpop.permute.xlu0 %951
      %953 = vrot.lane.b32.xlu0 %v483, 20
      %v954 = vpop.permute.xlu0 %953
      %955 = vrot.lane.b32.xlu0 %v486, 20
      %v956 = vpop.permute.xlu0 %955
      %957 = vrot.lane.b32.xlu0 %v488, 20
      %v958 = vpop.permute.xlu0 %957
      %959 = vrot.lane.b32.xlu0 %v499, 20
      %v960 = vpop.permute.xlu0 %959
      %961 = vrot.lane.b32.xlu0 %v501, 20
      %v962 = vpop.permute.xlu0 %961
      %995 = vrot.lane.b32.xlu0 %v231, 24
      %v996 = vpop.permute.xlu0 %995
      %997 = vrot.lane.b32.xlu0 %v232, 24
      %v998 = vpop.permute.xlu0 %997
      %999 = vrot.lane.b32.xlu0 %v234, 24
      %v1000 = vpop.permute.xlu0 %999
      %1001 = vrot.lane.b32.xlu0 %v235, 24
      %v1002 = vpop.permute.xlu0 %1001
      %1003 = vrot.lane.b32.xlu0 %v237, 24
      %v1004 = vpop.permute.xlu0 %1003
      %1005 = vrot.lane.b32.xlu0 %v238, 24
      %v1006 = vpop.permute.xlu0 %1005
      %1007 = vrot.lane.b32.xlu0 %v240, 24
      %v1008 = vpop.permute.xlu0 %1007
      %1009 = vrot.lane.b32.xlu0 %v241, 24
      %v1010 = vpop.permute.xlu0 %1009
      %1011 = vrot.lane.b32.xlu0 %v243, 24
      %v1012 = vpop.permute.xlu0 %1011
      %1013 = vrot.lane.b32.xlu0 %v244, 24
      %v1014 = vpop.permute.xlu0 %1013
      %1015 = vrot.lane.b32.xlu0 %v246, 24
      %v1016 = vpop.permute.xlu0 %1015
      %1017 = vrot.lane.b32.xlu0 %v247, 24
      %v1018 = vpop.permute.xlu0 %1017
      %1019 = vrot.lane.b32.xlu0 %v249, 24
      %v1020 = vpop.permute.xlu0 %1019
      %1021 = vrot.lane.b32.xlu0 %v250, 24
      %v1022 = vpop.permute.xlu0 %1021
      %1023 = vrot.lane.b32.xlu0 %v252, 24
      %v1024 = vpop.permute.xlu0 %1023
      %1025 = vrot.lane.b32.xlu0 %v253, 24
      %v1026 = vpop.permute.xlu0 %1025
      %1027 = vrot.lane.b32.xlu0 %v255, 24
      %v1028 = vpop.permute.xlu0 %1027
      %1029 = vrot.lane.b32.xlu0 %v256, 24
      %v1030 = vpop.permute.xlu0 %1029
      %1031 = vrot.lane.b32.xlu0 %v258, 24
      %v1032 = vpop.permute.xlu0 %1031
      %1033 = vrot.lane.b32.xlu0 %v259, 24
      %v1034 = vpop.permute.xlu0 %1033
      %1035 = vrot.lane.b32.xlu0 %v261, 24
      %v1036 = vpop.permute.xlu0 %1035
      %1037 = vrot.lane.b32.xlu0 %v262, 24
      %v1038 = vpop.permute.xlu0 %1037
      %1039 = vrot.lane.b32.xlu0 %v264, 24
      %v1040 = vpop.permute.xlu0 %1039
      %1041 = vrot.lane.b32.xlu0 %v265, 24
      %v1042 = vpop.permute.xlu0 %1041
      %1043 = vrot.lane.b32.xlu0 %v267, 24
      %v1044 = vpop.permute.xlu0 %1043
      %1045 = vrot.lane.b32.xlu0 %v268, 24
      %v1046 = vpop.permute.xlu0 %1045
      %1047 = vrot.lane.b32.xlu0 %v270, 24
      %v1048 = vpop.permute.xlu0 %1047
      %1049 = vrot.lane.b32.xlu0 %v271, 24
      %v1050 = vpop.permute.xlu0 %1049
      %1051 = vrot.lane.b32.xlu0 %v273, 24
      %v1052 = vpop.permute.xlu0 %1051
      %1053 = vrot.lane.b32.xlu0 %v274, 24
      %v1054 = vpop.permute.xlu0 %1053
      %1055 = vrot.lane.b32.xlu0 %v276, 24
      %v1056 = vpop.permute.xlu0 %1055
      %1057 = vrot.lane.b32.xlu0 %v277, 24
      %v1058 = vpop.permute.xlu0 %1057
      %1091 = vrot.lane.b32.xlu0 %v340, 28
      %v1092 = vpop.permute.xlu0 %1091
      %1093 = vrot.lane.b32.xlu0 %v342, 28
      %v1094 = vpop.permute.xlu0 %1093
      %1095 = vrot.lane.b32.xlu0 %v345, 28
      %v1096 = vpop.permute.xlu0 %1095
      %1097 = vrot.lane.b32.xlu0 %v347, 28
      %v1098 = vpop.permute.xlu0 %1097
      %1099 = vrot.lane.b32.xlu0 %v350, 28
      %v1100 = vpop.permute.xlu0 %1099
      %1101 = vrot.lane.b32.xlu0 %v352, 28
      %v1102 = vpop.permute.xlu0 %1101
      %1103 = vrot.lane.b32.xlu0 %v355, 28
      %v1104 = vpop.permute.xlu0 %1103
      %1105 = vrot.lane.b32.xlu0 %v357, 28
      %v1106 = vpop.permute.xlu0 %1105
      %1107 = vrot.lane.b32.xlu0 %v360, 28
      %v1108 = vpop.permute.xlu0 %1107
      %1109 = vrot.lane.b32.xlu0 %v362, 28
      %v1110 = vpop.permute.xlu0 %1109
      %1111 = vrot.lane.b32.xlu0 %v365, 28
      %v1112 = vpop.permute.xlu0 %1111
      %1113 = vrot.lane.b32.xlu0 %v367, 28
      %v1114 = vpop.permute.xlu0 %1113
      %1115 = vrot.lane.b32.xlu0 %v370, 28
      %v1116 = vpop.permute.xlu0 %1115
      %1117 = vrot.lane.b32.xlu0 %v372, 28
      %v1118 = vpop.permute.xlu0 %1117
      %1119 = vrot.lane.b32.xlu0 %v375, 28
      %v1120 = vpop.permute.xlu0 %1119
      %1121 = vrot.lane.b32.xlu0 %v377, 28
      %v1122 = vpop.permute.xlu0 %1121
      %1123 = vrot.lane.b32.xlu0 %v380, 28
      %v1124 = vpop.permute.xlu0 %1123
      %1125 = vrot.lane.b32.xlu0 %v382, 28
      %v1126 = vpop.permute.xlu0 %1125
      %1127 = vrot.lane.b32.xlu0 %v385, 28
      %v1128 = vpop.permute.xlu0 %1127
      %1129 = vrot.lane.b32.xlu0 %v387, 28
      %v1130 = vpop.permute.xlu0 %1129
      %1131 = vrot.lane.b32.xlu0 %v390, 28
      %v1132 = vpop.permute.xlu0 %1131
      %1133 = vrot.lane.b32.xlu0 %v392, 28
      %v1134 = vpop.permute.xlu0 %1133
      %1135 = vrot.lane.b32.xlu0 %v395, 28
      %v1136 = vpop.permute.xlu0 %1135
      %1137 = vrot.lane.b32.xlu0 %v397, 28
      %v1138 = vpop.permute.xlu0 %1137
      %1139 = vrot.lane.b32.xlu0 %v400, 28
      %v1140 = vpop.permute.xlu0 %1139
      %1141 = vrot.lane.b32.xlu0 %v402, 28
      %v1142 = vpop.permute.xlu0 %1141
      %1143 = vrot.lane.b32.xlu0 %v405, 28
      %v1144 = vpop.permute.xlu0 %1143
      %1145 = vrot.lane.b32.xlu0 %v407, 28
      %v1146 = vpop.permute.xlu0 %1145
      %1147 = vrot.lane.b32.xlu0 %v494, 28
      %v1148 = vpop.permute.xlu0 %1147
      %1149 = vrot.lane.b32.xlu0 %v496, 28
      %v1150 = vpop.permute.xlu0 %1149
      %1151 = vrot.lane.b32.xlu0 %v507, 28
      %v1152 = vpop.permute.xlu0 %1151
      %1153 = vrot.lane.b32.xlu0 %v509, 28
      %v1154 = vpop.permute.xlu0 %1153
      %1187 = vrot.lane.b32.xlu0 %v421, 32
      %v1188 = vpop.permute.xlu0 %1187
      %1189 = vrot.lane.b32.xlu0 %v423, 32
      %v1190 = vpop.permute.xlu0 %1189
      %1191 = vrot.lane.b32.xlu0 %v426, 32
      %v1192 = vpop.permute.xlu0 %1191
      %1193 = vrot.lane.b32.xlu0 %v428, 32
      %v1194 = vpop.permute.xlu0 %1193
      %1195 = vrot.lane.b32.xlu0 %v431, 32
      %v1196 = vpop.permute.xlu0 %1195
      %1197 = vrot.lane.b32.xlu0 %v433, 32
      %v1198 = vpop.permute.xlu0 %1197
      %1199 = vrot.lane.b32.xlu0 %v436, 32
      %v1200 = vpop.permute.xlu0 %1199
      %1201 = vrot.lane.b32.xlu0 %v438, 32
      %v1202 = vpop.permute.xlu0 %1201
      %1203 = vrot.lane.b32.xlu0 %v441, 32
      %v1204 = vpop.permute.xlu0 %1203
      %1205 = vrot.lane.b32.xlu0 %v443, 32
      %v1206 = vpop.permute.xlu0 %1205
      %1207 = vrot.lane.b32.xlu0 %v446, 32
      %v1208 = vpop.permute.xlu0 %1207
      %1209 = vrot.lane.b32.xlu0 %v448, 32
      %v1210 = vpop.permute.xlu0 %1209
      %1211 = vrot.lane.b32.xlu0 %v451, 32
      %v1212 = vpop.permute.xlu0 %1211
      %1213 = vrot.lane.b32.xlu0 %v453, 32
      %v1214 = vpop.permute.xlu0 %1213
      %1215 = vrot.lane.b32.xlu0 %v456, 32
      %v1216 = vpop.permute.xlu0 %1215
      %1217 = vrot.lane.b32.xlu0 %v458, 32
      %v1218 = vpop.permute.xlu0 %1217
      %1219 = vrot.lane.b32.xlu0 %v461, 32
      %v1220 = vpop.permute.xlu0 %1219
      %1221 = vrot.lane.b32.xlu0 %v463, 32
      %v1222 = vpop.permute.xlu0 %1221
      %1223 = vrot.lane.b32.xlu0 %v466, 32
      %v1224 = vpop.permute.xlu0 %1223
      %1225 = vrot.lane.b32.xlu0 %v468, 32
      %v1226 = vpop.permute.xlu0 %1225
      %1227 = vrot.lane.b32.xlu0 %v471, 32
      %v1228 = vpop.permute.xlu0 %1227
      %1229 = vrot.lane.b32.xlu0 %v473, 32
      %v1230 = vpop.permute.xlu0 %1229
      %1231 = vrot.lane.b32.xlu0 %v476, 32
      %v1232 = vpop.permute.xlu0 %1231
      %1233 = vrot.lane.b32.xlu0 %v478, 32
      %v1234 = vpop.permute.xlu0 %1233
      %1235 = vrot.lane.b32.xlu0 %v481, 32
      %v1236 = vpop.permute.xlu0 %1235
      %1237 = vrot.lane.b32.xlu0 %v483, 32
      %v1238 = vpop.permute.xlu0 %1237
      %1239 = vrot.lane.b32.xlu0 %v486, 32
      %v1240 = vpop.permute.xlu0 %1239
      %1241 = vrot.lane.b32.xlu0 %v488, 32
      %v1242 = vpop.permute.xlu0 %1241
      %1243 = vrot.lane.b32.xlu0 %v499, 32
      %v1244 = vpop.permute.xlu0 %1243
      %1245 = vrot.lane.b32.xlu0 %v501, 32
      %v1246 = vpop.permute.xlu0 %1245
      %1247 = vrot.lane.b32.xlu0 %v512, 32
      %v1248 = vpop.permute.xlu0 %1247
      %1249 = vrot.lane.b32.xlu0 %v514, 32
      %v1250 = vpop.permute.xlu0 %1249
      %vm1283 = vcmask 31744
      %v1284 = vsel %vm1283, %v225, %v516
      %v1285 = vsel %vm1283, %v226, %v518
      %v1286 = vsel %vm1283, %v228, %v520
      %v1287 = vsel %vm1283, %v229, %v522
      %v1288 = vsel %vm1283, %v231, %v524
      %v1289 = vsel %vm1283, %v232, %v526
      %v1290 = vsel %vm1283, %v234, %v528
      %v1291 = vsel %vm1283, %v235, %v530
      %v1292 = vsel %vm1283, %v237, %v532
      %v1293 = vsel %vm1283, %v238, %v534
      %v1294 = vsel %vm1283, %v240, %v536
      %v1295 = vsel %vm1283, %v241, %v538
      %v1296 = vsel %vm1283, %v243, %v540
      %v1297 = vsel %vm1283, %v244, %v542
      %v1298 = vsel %vm1283, %v246, %v544
      %v1299 = vsel %vm1283, %v247, %v546
      %v1300 = vsel %vm1283, %v249, %v548
      %v1301 = vsel %vm1283, %v250, %v550
      %v1302 = vsel %vm1283, %v252, %v552
      %v1303 = vsel %vm1283, %v253, %v554
      %v1304 = vsel %vm1283, %v255, %v556
      %v1305 = vsel %vm1283, %v256, %v558
      %v1306 = vsel %vm1283, %v258, %v560
      %v1307 = vsel %vm1283, %v259, %v562
      %v1308 = vsel %vm1283, %v261, %v564
      %v1309 = vsel %vm1283, %v262, %v566
      %v1310 = vsel %vm1283, %v264, %v568
      %v1311 = vsel %vm1283, %v265, %v570
      %v1312 = vsel %vm1283, %v267, %v572
      %v1313 = vsel %vm1283, %v268, %v574
      %v1314 = vsel %vm1283, %v270, %v576
      %v1315 = vsel %vm1283, %v271, %v578
      %vm1316 = vcmask 64512
      %v1317 = vsel %vm1316, %v1284, %v612
      %v1318 = vsel %vm1316, %v1285, %v614
      %v1319 = vsel %vm1316, %v1286, %v616
      %v1320 = vsel %vm1316, %v1287, %v618
      %v1321 = vsel %vm1316, %v1288, %v620
      %v1322 = vsel %vm1316, %v1289, %v622
      %v1323 = vsel %vm1316, %v1290, %v624
      %v1324 = vsel %vm1316, %v1291, %v626
      %v1325 = vsel %vm1316, %v1292, %v628
      %v1326 = vsel %vm1316, %v1293, %v630
      %v1327 = vsel %vm1316, %v1294, %v632
      %v1328 = vsel %vm1316, %v1295, %v634
      %v1329 = vsel %vm1316, %v1296, %v636
      %v1330 = vsel %vm1316, %v1297, %v638
      %v1331 = vsel %vm1316, %v1298, %v640
      %v1332 = vsel %vm1316, %v1299, %v642
      %v1333 = vsel %vm1316, %v1300, %v644
      %v1334 = vsel %vm1316, %v1301, %v646
      %v1335 = vsel %vm1316, %v1302, %v648
      %v1336 = vsel %vm1316, %v1303, %v650
      %v1337 = vsel %vm1316, %v1304, %v652
      %v1338 = vsel %vm1316, %v1305, %v654
      %v1339 = vsel %vm1316, %v1306, %v656
      %v1340 = vsel %vm1316, %v1307, %v658
      %v1341 = vsel %vm1316, %v1308, %v660
      %v1342 = vsel %vm1316, %v1309, %v662
      %v1343 = vsel %vm1316, %v1310, %v664
      %v1344 = vsel %vm1316, %v1311, %v666
      %v1345 = vsel %vm1316, %v1312, %v668
      %v1346 = vsel %vm1316, %v1313, %v670
      %v1347 = vsel %vm1316, %v1314, %v672
      %v1348 = vsel %vm1316, %v1315, %v674
      %vm1349 = vcmask 97280
      %v1350 = vsel %vm1349, %v1317, %v708
      %v1351 = vsel %vm1349, %v1318, %v710
      %v1352 = vsel %vm1349, %v1319, %v712
      %v1353 = vsel %vm1349, %v1320, %v714
      %v1354 = vsel %vm1349, %v1321, %v716
      %v1355 = vsel %vm1349, %v1322, %v718
      %v1356 = vsel %vm1349, %v1323, %v720
      %v1357 = vsel %vm1349, %v1324, %v722
      %v1358 = vsel %vm1349, %v1325, %v724
      %v1359 = vsel %vm1349, %v1326, %v726
      %v1360 = vsel %vm1349, %v1327, %v728
      %v1361 = vsel %vm1349, %v1328, %v730
      %v1362 = vsel %vm1349, %v1329, %v732
      %v1363 = vsel %vm1349, %v1330, %v734
      %v1364 = vsel %vm1349, %v1331, %v736
      %v1365 = vsel %vm1349, %v1332, %v738
      %v1366 = vsel %vm1349, %v1333, %v740
      %v1367 = vsel %vm1349, %v1334, %v742
      %v1368 = vsel %vm1349, %v1335, %v744
      %v1369 = vsel %vm1349, %v1336, %v746
      %v1370 = vsel %vm1349, %v1337, %v748
      %v1371 = vsel %vm1349, %v1338, %v750
      %v1372 = vsel %vm1349, %v1339, %v752
      %v1373 = vsel %vm1349, %v1340, %v754
      %v1374 = vsel %vm1349, %v1341, %v756
      %v1375 = vsel %vm1349, %v1342, %v758
      %v1376 = vsel %vm1349, %v1343, %v760
      %v1377 = vsel %vm1349, %v1344, %v762
      %v1378 = vsel %vm1349, %v1345, %v764
      %v1379 = vsel %vm1349, %v1346, %v766
      %v1380 = vsel %vm1349, %v1347, %v768
      %v1381 = vsel %vm1349, %v1348, %v770
      %vm1382 = vcmask 130048
      %v1383 = vsel %vm1382, %v1350, %v804
      %v1384 = vsel %vm1382, %v1351, %v806
      %v1385 = vsel %vm1382, %v1352, %v808
      %v1386 = vsel %vm1382, %v1353, %v810
      %v1387 = vsel %vm1382, %v1354, %v812
      %v1388 = vsel %vm1382, %v1355, %v814
      %v1389 = vsel %vm1382, %v1356, %v816
      %v1390 = vsel %vm1382, %v1357, %v818
      %v1391 = vsel %vm1382, %v1358, %v820
      %v1392 = vsel %vm1382, %v1359, %v822
      %v1393 = vsel %vm1382, %v1360, %v824
      %v1394 = vsel %vm1382, %v1361, %v826
      %v1395 = vsel %vm1382, %v1362, %v828
      %v1396 = vsel %vm1382, %v1363, %v830
      %v1397 = vsel %vm1382, %v1364, %v832
      %v1398 = vsel %vm1382, %v1365, %v834
      %v1399 = vsel %vm1382, %v1366, %v836
      %v1400 = vsel %vm1382, %v1367, %v838
      %v1401 = vsel %vm1382, %v1368, %v840
      %v1402 = vsel %vm1382, %v1369, %v842
      %v1403 = vsel %vm1382, %v1370, %v844
      %v1404 = vsel %vm1382, %v1371, %v846
      %v1405 = vsel %vm1382, %v1372, %v848
      %v1406 = vsel %vm1382, %v1373, %v850
      %v1407 = vsel %vm1382, %v1374, %v852
      %v1408 = vsel %vm1382, %v1375, %v854
      %v1409 = vsel %vm1382, %v1376, %v856
      %v1410 = vsel %vm1382, %v1377, %v858
      %v1411 = vsel %vm1382, %v1378, %v860
      %v1412 = vsel %vm1382, %v1379, %v862
      %v1413 = vsel %vm1382, %v1380, %v864
      %v1414 = vsel %vm1382, %v1381, %v866
      %vm1415 = vcmask 162816
      %v1416 = vsel %vm1415, %v1383, %v900
      %v1417 = vsel %vm1415, %v1384, %v902
      %v1418 = vsel %vm1415, %v1385, %v904
      %v1419 = vsel %vm1415, %v1386, %v906
      %v1420 = vsel %vm1415, %v1387, %v908
      %v1421 = vsel %vm1415, %v1388, %v910
      %v1422 = vsel %vm1415, %v1389, %v912
      %v1423 = vsel %vm1415, %v1390, %v914
      %v1424 = vsel %vm1415, %v1391, %v916
      %v1425 = vsel %vm1415, %v1392, %v918
      %v1426 = vsel %vm1415, %v1393, %v920
      %v1427 = vsel %vm1415, %v1394, %v922
      %v1428 = vsel %vm1415, %v1395, %v924
      %v1429 = vsel %vm1415, %v1396, %v926
      %v1430 = vsel %vm1415, %v1397, %v928
      %v1431 = vsel %vm1415, %v1398, %v930
      %v1432 = vsel %vm1415, %v1399, %v932
      %v1433 = vsel %vm1415, %v1400, %v934
      %v1434 = vsel %vm1415, %v1401, %v936
      %v1435 = vsel %vm1415, %v1402, %v938
      %v1436 = vsel %vm1415, %v1403, %v940
      %v1437 = vsel %vm1415, %v1404, %v942
      %v1438 = vsel %vm1415, %v1405, %v944
      %v1439 = vsel %vm1415, %v1406, %v946
      %v1440 = vsel %vm1415, %v1407, %v948
      %v1441 = vsel %vm1415, %v1408, %v950
      %v1442 = vsel %vm1415, %v1409, %v952
      %v1443 = vsel %vm1415, %v1410, %v954
      %v1444 = vsel %vm1415, %v1411, %v956
      %v1445 = vsel %vm1415, %v1412, %v958
      %v1446 = vsel %vm1415, %v1413, %v960
      %v1447 = vsel %vm1415, %v1414, %v962
      %vm1448 = vcmask 195584
      %v1449 = vsel %vm1448, %v1416, %v996
      %v1450 = vsel %vm1448, %v1417, %v998
      %v1451 = vsel %vm1448, %v1418, %v1000
      %v1452 = vsel %vm1448, %v1419, %v1002
      %v1453 = vsel %vm1448, %v1420, %v1004
      %v1454 = vsel %vm1448, %v1421, %v1006
      %v1455 = vsel %vm1448, %v1422, %v1008
      %v1456 = vsel %vm1448, %v1423, %v1010
      %v1457 = vsel %vm1448, %v1424, %v1012
      %v1458 = vsel %vm1448, %v1425, %v1014
      %v1459 = vsel %vm1448, %v1426, %v1016
      %v1460 = vsel %vm1448, %v1427, %v1018
      %v1461 = vsel %vm1448, %v1428, %v1020
      %v1462 = vsel %vm1448, %v1429, %v1022
      %v1463 = vsel %vm1448, %v1430, %v1024
      %v1464 = vsel %vm1448, %v1431, %v1026
      %v1465 = vsel %vm1448, %v1432, %v1028
      %v1466 = vsel %vm1448, %v1433, %v1030
      %v1467 = vsel %vm1448, %v1434, %v1032
      %v1468 = vsel %vm1448, %v1435, %v1034
      %v1469 = vsel %vm1448, %v1436, %v1036
      %v1470 = vsel %vm1448, %v1437, %v1038
      %v1471 = vsel %vm1448, %v1438, %v1040
      %v1472 = vsel %vm1448, %v1439, %v1042
      %v1473 = vsel %vm1448, %v1440, %v1044
      %v1474 = vsel %vm1448, %v1441, %v1046
      %v1475 = vsel %vm1448, %v1442, %v1048
      %v1476 = vsel %vm1448, %v1443, %v1050
      %v1477 = vsel %vm1448, %v1444, %v1052
      %v1478 = vsel %vm1448, %v1445, %v1054
      %v1479 = vsel %vm1448, %v1446, %v1056
      %v1480 = vsel %vm1448, %v1447, %v1058
      %vm1481 = vcmask 228352
      %v1482 = vsel %vm1481, %v1449, %v1092
      %v1483 = vsel %vm1481, %v1450, %v1094
      %v1484 = vsel %vm1481, %v1451, %v1096
      %v1485 = vsel %vm1481, %v1452, %v1098
      %v1486 = vsel %vm1481, %v1453, %v1100
      %v1487 = vsel %vm1481, %v1454, %v1102
      %v1488 = vsel %vm1481, %v1455, %v1104
      %v1489 = vsel %vm1481, %v1456, %v1106
      %v1490 = vsel %vm1481, %v1457, %v1108
      %v1491 = vsel %vm1481, %v1458, %v1110
      %v1492 = vsel %vm1481, %v1459, %v1112
      %v1493 = vsel %vm1481, %v1460, %v1114
      %v1494 = vsel %vm1481, %v1461, %v1116
      %v1495 = vsel %vm1481, %v1462, %v1118
      %v1496 = vsel %vm1481, %v1463, %v1120
      %v1497 = vsel %vm1481, %v1464, %v1122
      %v1498 = vsel %vm1481, %v1465, %v1124
      %v1499 = vsel %vm1481, %v1466, %v1126
      %v1500 = vsel %vm1481, %v1467, %v1128
      %v1501 = vsel %vm1481, %v1468, %v1130
      %v1502 = vsel %vm1481, %v1469, %v1132
      %v1503 = vsel %vm1481, %v1470, %v1134
      %v1504 = vsel %vm1481, %v1471, %v1136
      %v1505 = vsel %vm1481, %v1472, %v1138
      %v1506 = vsel %vm1481, %v1473, %v1140
      %v1507 = vsel %vm1481, %v1474, %v1142
      %v1508 = vsel %vm1481, %v1475, %v1144
      %v1509 = vsel %vm1481, %v1476, %v1146
      %v1510 = vsel %vm1481, %v1477, %v1148
      %v1511 = vsel %vm1481, %v1478, %v1150
      %v1512 = vsel %vm1481, %v1479, %v1152
      %v1513 = vsel %vm1481, %v1480, %v1154
      %vm1514 = vcmask 261120
      %v1515 = vsel %vm1514, %v1482, %v1188
      %v1516 = vsel %vm1514, %v1483, %v1190
      %v1517 = vsel %vm1514, %v1484, %v1192
      %v1518 = vsel %vm1514, %v1485, %v1194
      %v1519 = vsel %vm1514, %v1486, %v1196
      %v1520 = vsel %vm1514, %v1487, %v1198
      %v1521 = vsel %vm1514, %v1488, %v1200
      %v1522 = vsel %vm1514, %v1489, %v1202
      %v1523 = vsel %vm1514, %v1490, %v1204
      %v1524 = vsel %vm1514, %v1491, %v1206
      %v1525 = vsel %vm1514, %v1492, %v1208
      %v1526 = vsel %vm1514, %v1493, %v1210
      %v1527 = vsel %vm1514, %v1494, %v1212
      %v1528 = vsel %vm1514, %v1495, %v1214
      %v1529 = vsel %vm1514, %v1496, %v1216
      %v1530 = vsel %vm1514, %v1497, %v1218
      %v1531 = vsel %vm1514, %v1498, %v1220
      %v1532 = vsel %vm1514, %v1499, %v1222
      %v1533 = vsel %vm1514, %v1500, %v1224
      %v1534 = vsel %vm1514, %v1501, %v1226
      %v1535 = vsel %vm1514, %v1502, %v1228
      %v1536 = vsel %vm1514, %v1503, %v1230
      %v1537 = vsel %vm1514, %v1504, %v1232
      %v1538 = vsel %vm1514, %v1505, %v1234
      %v1539 = vsel %vm1514, %v1506, %v1236
      %v1540 = vsel %vm1514, %v1507, %v1238
      %v1541 = vsel %vm1514, %v1508, %v1240
      %v1542 = vsel %vm1514, %v1509, %v1242
      %v1543 = vsel %vm1514, %v1510, %v1244
      %v1544 = vsel %vm1514, %v1511, %v1246
      %v1545 = vsel %vm1514, %v1512, %v1248
      %v1546 = vsel %vm1514, %v1513, %v1250
      %v1547 = vld [vmem:[%s1] sm:$0xff]
      %v1548 = vld [vmem:[%s1 + $0x8] sm:$0xff]
      %v1549 = vld [vmem:[%s1 + $0x10] sm:$0xff]
      %v1550 = vld [vmem:[%s1 + $0x18] sm:$0xff]
      %v1551 = vld [vmem:[%s1 + $0x20] sm:$0xf]
      %v1552 = vld [vmem:[%s2] sm:$0x1]
      %v1554 = vperm.slane %v1552, 0
      %vm1556 = vcmask 293888
      %v1558 = vsel %vm1556, %v1515, 0
      %v1561 = vsel %vm1556, %v1516, 0
      %v1564 = vsel %vm1556, %v1517, 0
      %v1567 = vsel %vm1556, %v1518, 0
      %v1570 = vsel %vm1556, %v1519, 0
      %v1573 = vsel %vm1556, %v1520, 0
      %v1576 = vsel %vm1556, %v1521, 0
      %v1579 = vsel %vm1556, %v1522, 0
      %v1582 = vsel %vm1556, %v1523, 0
      %v1585 = vsel %vm1556, %v1524, 0
      %v1588 = vsel %vm1556, %v1525, 0
      %v1591 = vsel %vm1556, %v1526, 0
      %v1594 = vsel %vm1556, %v1527, 0
      %v1597 = vsel %vm1556, %v1528, 0
      %v1600 = vsel %vm1556, %v1529, 0
      %v1603 = vsel %vm1556, %v1530, 0
      %v1606 = vsel %vm1556, %v1531, 0
      %v1609 = vsel %vm1556, %v1532, 0
      %v1612 = vsel %vm1556, %v1533, 0
      %v1615 = vsel %vm1556, %v1534, 0
      %v1618 = vsel %vm1556, %v1535, 0
      %v1621 = vsel %vm1556, %v1536, 0
      %v1624 = vsel %vm1556, %v1537, 0
      %v1627 = vsel %vm1556, %v1538, 0
      %v1630 = vsel %vm1556, %v1539, 0
      %v1633 = vsel %vm1556, %v1540, 0
      %v1636 = vsel %vm1556, %v1541, 0
      %v1639 = vsel %vm1556, %v1542, 0
      %v1642 = vsel %vm1556, %v1543, 0
      %v1645 = vsel %vm1556, %v1544, 0
      %v1648 = vsel %vm1556, %v1545, 0
      %v1651 = vsel %vm1556, %v1546, 0
      %vm1653 = vcmask 1043456
      %v1655 = vsel %vm1653, %v1551, 0
      %1657 = vmatpush.msra.mxu0 0.0
      %1658 = vmatpush.msra.mxu0 0.0
      %1659 = vmatpush.msra.mxu0 0.0
      %1660 = vmatpush.msra.mxu0 0.0
      %1661 = vmatpush.msra.mxu0 0.0
      %1662 = vmatpush.msra.mxu0 0.0
      %1663 = vmatpush.msra.mxu0 0.0
      %1664 = vmatpush.msra.mxu0 0.0
      %1665 = vmatpush.msra.mxu0 0.0
      %1666 = vmatpush.msra.mxu0 0.0
      %1667 = vmatpush.msra.mxu0 0.0
      %1668 = vmatpush.msra.mxu0 %v1655
      %1669 = vmatpush.msra.mxu0 %v1550
      %1670 = vmatpush.msra.mxu0 %v1549
      %1671 = vmatpush.msra.mxu0 %v1548
      %1672 = vmatpush.msra.mxu0 %v1547
      %1673 = vmatmul.f32.gmra.mxu0 %v1558
      %v1674 = vpop.f32.mrf.mxu0
      %v1675 = vadd.f32 %v1554, %v1674
      %1676 = vmatmul.f32.gmra.mxu0 %v1561
      %v1677 = vpop.f32.mrf.mxu0
      %v1678 = vadd.f32 %v1554, %v1677
      %1679 = vmatmul.f32.gmra.mxu0 %v1564
      %v1680 = vpop.f32.mrf.mxu0
      %v1681 = vadd.f32 %v1554, %v1680
      %1682 = vmatmul.f32.gmra.mxu0 %v1567
      %v1683 = vpop.f32.mrf.mxu0
      %v1684 = vadd.f32 %v1554, %v1683
      %1685 = vmatmul.f32.gmra.mxu0 %v1570
      %v1686 = vpop.f32.mrf.mxu0
      %v1687 = vadd.f32 %v1554, %v1686
      %1688 = vmatmul.f32.gmra.mxu0 %v1573
      %v1689 = vpop.f32.mrf.mxu0
      %v1690 = vadd.f32 %v1554, %v1689
      %1691 = vmatmul.f32.gmra.mxu0 %v1576
      %v1692 = vpop.f32.mrf.mxu0
      %v1693 = vadd.f32 %v1554, %v1692
      %1694 = vmatmul.f32.gmra.mxu0 %v1579
      %v1695 = vpop.f32.mrf.mxu0
      %v1696 = vadd.f32 %v1554, %v1695
      %1697 = vmatmul.f32.gmra.mxu0 %v1582
      %v1698 = vpop.f32.mrf.mxu0
      %v1699 = vadd.f32 %v1554, %v1698
      %1700 = vmatmul.f32.gmra.mxu0 %v1585
      %v1701 = vpop.f32.mrf.mxu0
      %v1702 = vadd.f32 %v1554, %v1701
      %1703 = vmatmul.f32.gmra.mxu0 %v1588
      %v1704 = vpop.f32.mrf.mxu0
      %v1705 = vadd.f32 %v1554, %v1704
      %1706 = vmatmul.f32.gmra.mxu0 %v1591
      %v1707 = vpop.f32.mrf.mxu0
      %v1708 = vadd.f32 %v1554, %v1707
      %1709 = vmatmul.f32.gmra.mxu0 %v1594
      %v1710 = vpop.f32.mrf.mxu0
      %v1711 = vadd.f32 %v1554, %v1710
      %1712 = vmatmul.f32.gmra.mxu0 %v1597
      %v1713 = vpop.f32.mrf.mxu0
      %v1714 = vadd.f32 %v1554, %v1713
      %1715 = vmatmul.f32.gmra.mxu0 %v1600
      %v1716 = vpop.f32.mrf.mxu0
      %v1717 = vadd.f32 %v1554, %v1716
      %1718 = vmatmul.f32.gmra.mxu0 %v1603
      %v1719 = vpop.f32.mrf.mxu0
      %v1720 = vadd.f32 %v1554, %v1719
      %1721 = vmatmul.f32.gmra.mxu0 %v1606
      %v1722 = vpop.f32.mrf.mxu0
      %v1723 = vadd.f32 %v1554, %v1722
      %1724 = vmatmul.f32.gmra.mxu0 %v1609
      %v1725 = vpop.f32.mrf.mxu0
      %v1726 = vadd.f32 %v1554, %v1725
      %1727 = vmatmul.f32.gmra.mxu0 %v1612
      %v1728 = vpop.f32.mrf.mxu0
      %v1729 = vadd.f32 %v1554, %v1728
      %1730 = vmatmul.f32.gmra.mxu0 %v1615
      %v1731 = vpop.f32.mrf.mxu0
      %v1732 = vadd.f32 %v1554, %v1731
      %1733 = vmatmul.f32.gmra.mxu0 %v1618
      %v1734 = vpop.f32.mrf.mxu0
      %v1735 = vadd.f32 %v1554, %v1734
      %1736 = vmatmul.f32.gmra.mxu0 %v1621
      %v1737 = vpop.f32.mrf.mxu0
      %v1738 = vadd.f32 %v1554, %v1737
      %1739 = vmatmul.f32.gmra.mxu0 %v1624
      %v1740 = vpop.f32.mrf.mxu0
      %v1741 = vadd.f32 %v1554, %v1740
      %1742 = vmatmul.f32.gmra.mxu0 %v1627
      %v1743 = vpop.f32.mrf.mxu0
      %v1744 = vadd.f32 %v1554, %v1743
      %1745 = vmatmul.f32.gmra.mxu0 %v1630
      %v1746 = vpop.f32.mrf.mxu0
      %v1747 = vadd.f32 %v1554, %v1746
      %1748 = vmatmul.f32.gmra.mxu0 %v1633
      %v1749 = vpop.f32.mrf.mxu0
      %v1750 = vadd.f32 %v1554, %v1749
      %1751 = vmatmul.f32.gmra.mxu0 %v1636
      %v1752 = vpop.f32.mrf.mxu0
      %v1753 = vadd.f32 %v1554, %v1752
      %1754 = vmatmul.f32.gmra.mxu0 %v1639
      %v1755 = vpop.f32.mrf.mxu0
      %v1756 = vadd.f32 %v1554, %v1755
      %1757 = vmatmul.f32.gmra.mxu0 %v1642
      %v1758 = vpop.f32.mrf.mxu0
      %v1759 = vadd.f32 %v1554, %v1758
      %1760 = vmatmul.f32.gmra.mxu0 %v1645
      %v1761 = vpop.f32.mrf.mxu0
      %v1762 = vadd.f32 %v1554, %v1761
      %1763 = vmatmul.f32.gmra.mxu0 %v1648
      %v1764 = vpop.f32.mrf.mxu0
      %v1765 = vadd.f32 %v1554, %v1764
      %1766 = vmatmul.f32.gmra.mxu0 %v1651
      %v1767 = vpop.f32.mrf.mxu0
      %v1768 = vadd.f32 %v1554, %v1767
      %1769 = vdwg.mxu0
      %v1770 = vmax.f32 %v1675, 0.0
      %v1771 = vmax.f32 %v1678, 0.0
      %v1772 = vmax.f32 %v1681, 0.0
      %v1773 = vmax.f32 %v1684, 0.0
      %v1774 = vmax.f32 %v1687, 0.0
      %v1775 = vmax.f32 %v1690, 0.0
      %v1776 = vmax.f32 %v1693, 0.0
      %v1777 = vmax.f32 %v1696, 0.0
      %v1778 = vmax.f32 %v1699, 0.0
      %v1779 = vmax.f32 %v1702, 0.0
      %v1780 = vmax.f32 %v1705, 0.0
      %v1781 = vmax.f32 %v1708, 0.0
      %v1782 = vmax.f32 %v1711, 0.0
      %v1783 = vmax.f32 %v1714, 0.0
      %v1784 = vmax.f32 %v1717, 0.0
      %v1785 = vmax.f32 %v1720, 0.0
      %v1786 = vmax.f32 %v1723, 0.0
      %v1787 = vmax.f32 %v1726, 0.0
      %v1788 = vmax.f32 %v1729, 0.0
      %v1789 = vmax.f32 %v1732, 0.0
      %v1790 = vmax.f32 %v1735, 0.0
      %v1791 = vmax.f32 %v1738, 0.0
      %v1792 = vmax.f32 %v1741, 0.0
      %v1793 = vmax.f32 %v1744, 0.0
      %v1794 = vmax.f32 %v1747, 0.0
      %v1795 = vmax.f32 %v1750, 0.0
      %v1796 = vmax.f32 %v1753, 0.0
      %v1797 = vmax.f32 %v1756, 0.0
      %v1798 = vmax.f32 %v1759, 0.0
      %v1799 = vmax.f32 %v1762, 0.0
      %v1800 = vmax.f32 %v1765, 0.0
      %v1801 = vmax.f32 %v1768, 0.0
      %v1802 = vld [vmem:[%s3] sm:$0xff]
      %v1803 = vld [vmem:[%s3 + $0x8] sm:$0xff]
      %v1804 = vld [vmem:[%s3 + $0x10] sm:$0xff]
      %v1805 = vld [vmem:[%s3 + $0x18] sm:$0xff]
      %v1806 = vld [vmem:[%s4] sm:$0x1]
      %v1808 = vperm.slane %v1806, 0
      %v1811 = vsel %vm1514, %v1770, 0
      %v1814 = vsel %vm1514, %v1771, 0
      %v1817 = vsel %vm1514, %v1772, 0
      %v1820 = vsel %vm1514, %v1773, 0
      %v1823 = vsel %vm1514, %v1774, 0
      %v1826 = vsel %vm1514, %v1775, 0
      %v1829 = vsel %vm1514, %v1776, 0
      %v1832 = vsel %vm1514, %v1777, 0
      %v1835 = vsel %vm1514, %v1778, 0
      %v1838 = vsel %vm1514, %v1779, 0
      %v1841 = vsel %vm1514, %v1780, 0
      %v1844 = vsel %vm1514, %v1781, 0
      %v1847 = vsel %vm1514, %v1782, 0
      %v1850 = vsel %vm1514, %v1783, 0
      %v1853 = vsel %vm1514, %v1784, 0
      %v1856 = vsel %vm1514, %v1785, 0
      %v1859 = vsel %vm1514, %v1786, 0
      %v1862 = vsel %vm1514, %v1787, 0
      %v1865 = vsel %vm1514, %v1788, 0
      %v1868 = vsel %vm1514, %v1789, 0
      %v1871 = vsel %vm1514, %v1790, 0
      %v1874 = vsel %vm1514, %v1791, 0
      %v1877 = vsel %vm1514, %v1792, 0
      %v1880 = vsel %vm1514, %v1793, 0
      %v1883 = vsel %vm1514, %v1794, 0
      %v1886 = vsel %vm1514, %v1795, 0
      %v1889 = vsel %vm1514, %v1796, 0
      %v1892 = vsel %vm1514, %v1797, 0
      %v1895 = vsel %vm1514, %v1798, 0
      %v1898 = vsel %vm1514, %v1799, 0
      %v1901 = vsel %vm1514, %v1800, 0
      %v1904 = vsel %vm1514, %v1801, 0
      %1906 = vmatpush.msra.mxu0 0.0
      %1907 = vmatpush.msra.mxu0 0.0
      %1908 = vmatpush.msra.mxu0 0.0
      %1909 = vmatpush.msra.mxu0 0.0
      %1910 = vmatpush.msra.mxu0 0.0
      %1911 = vmatpush.msra.mxu0 0.0
      %1912 = vmatpush.msra.mxu0 0.0
      %1913 = vmatpush.msra.mxu0 0.0
      %1914 = vmatpush.msra.mxu0 0.0
      %1915 = vmatpush.msra.mxu0 0.0
      %1916 = vmatpush.msra.mxu0 0.0
      %1917 = vmatpush.msra.mxu0 0.0
      %1918 = vmatpush.msra.mxu0 %v1805
      %1919 = vmatpush.msra.mxu0 %v1804
      %1920 = vmatpush.msra.mxu0 %v1803
      %1921 = vmatpush.msra.mxu0 %v1802
      %1922 = vmatmul.f32.gmra.mxu0 %v1811
      %v1923 = vpop.f32.mrf.mxu0
      %v1924 = vadd.f32 %v1808, %v1923
      %1925 = vmatmul.f32.gmra.mxu0 %v1814
      %v1926 = vpop.f32.mrf.mxu0
      %v1927 = vadd.f32 %v1808, %v1926
      %1928 = vmatmul.f32.gmra.mxu0 %v1817
      %v1929 = vpop.f32.mrf.mxu0
      %v1930 = vadd.f32 %v1808, %v1929
      %1931 = vmatmul.f32.gmra.mxu0 %v1820
      %v1932 = vpop.f32.mrf.mxu0
      %v1933 = vadd.f32 %v1808, %v1932
      %1934 = vmatmul.f32.gmra.mxu0 %v1823
      %v1935 = vpop.f32.mrf.mxu0
      %v1936 = vadd.f32 %v1808, %v1935
      %1937 = vmatmul.f32.gmra.mxu0 %v1826
      %v1938 = vpop.f32.mrf.mxu0
      %v1939 = vadd.f32 %v1808, %v1938
      %1940 = vmatmul.f32.gmra.mxu0 %v1829
      %v1941 = vpop.f32.mrf.mxu0
      %v1942 = vadd.f32 %v1808, %v1941
      %1943 = vmatmul.f32.gmra.mxu0 %v1832
      %v1944 = vpop.f32.mrf.mxu0
      %v1945 = vadd.f32 %v1808, %v1944
      %1946 = vmatmul.f32.gmra.mxu0 %v1835
      %v1947 = vpop.f32.mrf.mxu0
      %v1948 = vadd.f32 %v1808, %v1947
      %1949 = vmatmul.f32.gmra.mxu0 %v1838
      %v1950 = vpop.f32.mrf.mxu0
      %v1951 = vadd.f32 %v1808, %v1950
      %1952 = vmatmul.f32.gmra.mxu0 %v1841
      %v1953 = vpop.f32.mrf.mxu0
      %v1954 = vadd.f32 %v1808, %v1953
      %1955 = vmatmul.f32.gmra.mxu0 %v1844
      %v1956 = vpop.f32.mrf.mxu0
      %v1957 = vadd.f32 %v1808, %v1956
      %1958 = vmatmul.f32.gmra.mxu0 %v1847
      %v1959 = vpop.f32.mrf.mxu0
      %v1960 = vadd.f32 %v1808, %v1959
      %1961 = vmatmul.f32.gmra.mxu0 %v1850
      %v1962 = vpop.f32.mrf.mxu0
      %v1963 = vadd.f32 %v1808, %v1962
      %1964 = vmatmul.f32.gmra.mxu0 %v1853
      %v1965 = vpop.f32.mrf.mxu0
      %v1966 = vadd.f32 %v1808, %v1965
      %1967 = vmatmul.f32.gmra.mxu0 %v1856
      %v1968 = vpop.f32.mrf.mxu0
      %v1969 = vadd.f32 %v1808, %v1968
      %1970 = vmatmul.f32.gmra.mxu0 %v1859
      %v1971 = vpop.f32.mrf.mxu0
      %v1972 = vadd.f32 %v1808, %v1971
      %1973 = vmatmul.f32.gmra.mxu0 %v1862
      %v1974 = vpop.f32.mrf.mxu0
      %v1975 = vadd.f32 %v1808, %v1974
      %1976 = vmatmul.f32.gmra.mxu0 %v1865
      %v1977 = vpop.f32.mrf.mxu0
      %v1978 = vadd.f32 %v1808, %v1977
      %1979 = vmatmul.f32.gmra.mxu0 %v1868
      %v1980 = vpop.f32.mrf.mxu0
      %v1981 = vadd.f32 %v1808, %v1980
      %1982 = vmatmul.f32.gmra.mxu0 %v1871
      %v1983 = vpop.f32.mrf.mxu0
      %v1984 = vadd.f32 %v1808, %v1983
      %1985 = vmatmul.f32.gmra.mxu0 %v1874
      %v1986 = vpop.f32.mrf.mxu0
      %v1987 = vadd.f32 %v1808, %v1986
      %1988 = vmatmul.f32.gmra.mxu0 %v1877
      %v1989 = vpop.f32.mrf.mxu0
      %v1990 = vadd.f32 %v1808, %v1989
      %1991 = vmatmul.f32.gmra.mxu0 %v1880
      %v1992 = vpop.f32.mrf.mxu0
      %v1993 = vadd.f32 %v1808, %v1992
      %1994 = vmatmul.f32.gmra.mxu0 %v1883
      %v1995 = vpop.f32.mrf.mxu0
      %v1996 = vadd.f32 %v1808, %v1995
      %1997 = vmatmul.f32.gmra.mxu0 %v1886
      %v1998 = vpop.f32.mrf.mxu0
      %v1999 = vadd.f32 %v1808, %v1998
      %2000 = vmatmul.f32.gmra.mxu0 %v1889
      %v2001 = vpop.f32.mrf.mxu0
      %v2002 = vadd.f32 %v1808, %v2001
      %2003 = vmatmul.f32.gmra.mxu0 %v1892
      %v2004 = vpop.f32.mrf.mxu0
      %v2005 = vadd.f32 %v1808, %v2004
      %2006 = vmatmul.f32.gmra.mxu0 %v1895
      %v2007 = vpop.f32.mrf.mxu0
      %v2008 = vadd.f32 %v1808, %v2007
      %2009 = vmatmul.f32.gmra.mxu0 %v1898
      %v2010 = vpop.f32.mrf.mxu0
      %v2011 = vadd.f32 %v1808, %v2010
      %2012 = vmatmul.f32.gmra.mxu0 %v1901
      %v2013 = vpop.f32.mrf.mxu0
      %v2014 = vadd.f32 %v1808, %v2013
      %2015 = vmatmul.f32.gmra.mxu0 %v1904
      %v2016 = vpop.f32.mrf.mxu0
      %v2017 = vadd.f32 %v1808, %v2016
      %2018 = vdwg.mxu0
      %2019 = vxpose.xlu0.b32.start [1/16] %v1924, 128
      %2020 = vxpose.xlu0.b32.cont [2/16] %v1927, 128
      %2021 = vxpose.xlu0.b32.cont [3/16] %v1930, 128
      %2022 = vxpose.xlu0.b32.cont [4/16] %v1933, 128
      %2023 = vxpose.xlu0.b32.cont [5/16] %v1936, 128
      %2024 = vxpose.xlu0.b32.cont [6/16] %v1939, 128
      %2025 = vxpose.xlu0.b32.cont [7/16] %v1942, 128
      %2026 = vxpose.xlu0.b32.cont [8/16] %v1945, 128
      %2027 = vxpose.xlu0.b32.cont [9/16] %v1948, 128
      %2028 = vxpose.xlu0.b32.cont [10/16] %v1951, 128
      %2029 = vxpose.xlu0.b32.cont [11/16] %v1954, 128
      %2030 = vxpose.xlu0.b32.cont [12/16] %v1957, 128
      %2031 = vxpose.xlu0.b32.cont [13/16] %v1960, 128
      %2032 = vxpose.xlu0.b32.cont [14/16] %v1963, 128
      %2033 = vxpose.xlu0.b32.cont [15/16] %v1966, 128
      %2034 = vxpose.xlu0.b32.end [16/16] %v1969, 128
      %v2035 = vpop.trf.xlu0
      %v2036 = vpop.trf.xlu0
      %v2037 = vpop.trf.xlu0
      %v2038 = vpop.trf.xlu0
      %v2039 = vpop.trf.xlu0
      %v2040 = vpop.trf.xlu0
      %v2041 = vpop.trf.xlu0
      %v2042 = vpop.trf.xlu0
      %v2043 = vpop.trf.xlu0
      %v2044 = vpop.trf.xlu0
      %v2045 = vpop.trf.xlu0
      %v2046 = vpop.trf.xlu0
      %v2047 = vpop.trf.xlu0
      %v2048 = vpop.trf.xlu0
      %v2049 = vpop.trf.xlu0
      %v2050 = vpop.trf.xlu0
      %2051 = vxpose.xlu0.b32.start [1/16] %v1972, 128
      %2052 = vxpose.xlu0.b32.cont [2/16] %v1975, 128
      %2053 = vxpose.xlu0.b32.cont [3/16] %v1978, 128
      %2054 = vxpose.xlu0.b32.cont [4/16] %v1981, 128
      %2055 = vxpose.xlu0.b32.cont [5/16] %v1984, 128
      %2056 = vxpose.xlu0.b32.cont [6/16] %v1987, 128
      %2057 = vxpose.xlu0.b32.cont [7/16] %v1990, 128
      %2058 = vxpose.xlu0.b32.cont [8/16] %v1993, 128
      %2059 = vxpose.xlu0.b32.cont [9/16] %v1996, 128
      %2060 = vxpose.xlu0.b32.cont [10/16] %v1999, 128
      %2061 = vxpose.xlu0.b32.cont [11/16] %v2002, 128
      %2062 = vxpose.xlu0.b32.cont [12/16] %v2005, 128
      %2063 = vxpose.xlu0.b32.cont [13/16] %v2008, 128
      %2064 = vxpose.xlu0.b32.cont [14/16] %v2011, 128
      %2065 = vxpose.xlu0.b32.cont [15/16] %v2014, 128
      %2066 = vxpose.xlu0.b32.end [16/16] %v2017, 128
      %v2067 = vpop.trf.xlu0
      %v2068 = vpop.trf.xlu0
      %v2069 = vpop.trf.xlu0
      %v2070 = vpop.trf.xlu0
      %v2071 = vpop.trf.xlu0
      %v2072 = vpop.trf.xlu0
      %v2073 = vpop.trf.xlu0
      %v2074 = vpop.trf.xlu0
      %v2075 = vpop.trf.xlu0
      %v2076 = vpop.trf.xlu0
      %v2077 = vpop.trf.xlu0
      %v2078 = vpop.trf.xlu0
      %v2079 = vpop.trf.xlu0
      %v2080 = vpop.trf.xlu0
      %v2081 = vpop.trf.xlu0
      %v2082 = vpop.trf.xlu0
      %2083 = vst [vmem:[%s224] sm:$0xff] %v2035
      %2084 = vst [vmem:[%s224 + $0x8] sm:$0xff] %v2067
      %2085 = vst [vmem:[%s224 + $0x10] sm:$0xff] %v2036
      %2086 = vst [vmem:[%s224 + $0x18] sm:$0xff] %v2068
      %2087 = vst [vmem:[%s224 + $0x20] sm:$0x1f] %v2037
      %2088 = vst [vmem:[%s224 + $0x28] sm:$0x1f] %v2069
      %p2089 = scmp.lt.s32.totalorder %s16, 1
      %s2090 = scalar_select %p2089, %s16, 1
      %s2091 = smul.addr %s2090, 6
      %s2092 = smul.addr %s2091, 8
      %s2093 = scalar_lea.vmem %s5, %s2092
      // Predicated region
      $region41: #{segmentation_forward.1} parent=39 // pred_check
        %p2094 = pneg %p144
      $region42: #{segmentation_forward.1} parent=39 // pred_check_branch
        %2096 = sbr.rel (%p2094) target = $region44
      $region43: #{segmentation_forward.1} parent=39 // pred_region
        _
      $region44: #{segmentation_forward.1} parent=39 // pred_fallthru
        _
    $region40: #{segmentation_forward.1} parent=5 // pred_fallthru
      _
    %p2097 = scmp.le.s32.totalorder 2, %s11
    // Predicated region
    $region45: #{segmentation_forward.1} parent=5 // pred_check
      %p2098 = pneg %p2097
    $region46: #{segmentation_forward.1} parent=5 // pred_check_branch
      %2100 = sbr.rel (%p2098) target = $region48
    $region47: #{segmentation_forward.1} parent=5 // pred_region
      %s2101 = ssub.s32 %s11, 2
      // Predicated region
      $region49: #{segmentation_forward.1} parent=47 // pred_check
        %p2102 = pneg %p150
      $region50: #{segmentation_forward.1} parent=47 // pred_check_branch
        %2104 = sbr.rel (%p2102) target = $region52
      $region51: #{segmentation_forward.1} parent=47 // pred_region
        %p2105 = scmp.lt.s32.totalorder %s17, 1
        %s2106 = scalar_select %p2105, %s17, 1
        %s2107 = smul.addr %s2106, 6
        %s2108 = smul.addr %s2107, 8
        %s2109 = scalar_lea.vmem %s5, %s2108
      $region52: #{segmentation_forward.1} parent=47 // pred_fallthru
        _
    $region48: #{segmentation_forward.1} parent=5 // pred_fallthru
      _
  $region6: #{segmentation_forward.1} parent=0 // loop_footer
    %s15 = sadd.s32 1, %s11
  $region7: #{segmentation_forward.1} parent=0 // loop_footer_branch
    %10 = sbr.rel target = $region3
  $region8: #{segmentation_forward.1} parent=0 // loop_exit
    _

</llo_original>
